<compile_context>
chip_gen: v6e
topology: v6e:2x2x1
jax: 0.10.0
libtpu: 0.0.40
codegen_flags: <defaults>
</compile_context>

<pallas_src>
import jax
import jax.numpy as jnp
from jax.experimental import pallas as pl
from jax.experimental.pallas import tpu as pltpu

EPS = 1e-5
LEAK = 0.2
TM_MAX = 512                      # max rows (M = N*OH*OW) per tile
VMEM_LIMIT = 32 * 1024 * 1024     # fits comfortably on v5e/v6e/v7x


# ---------------------------------------------------------------------------
# Pallas kernels
# ---------------------------------------------------------------------------
def _matmul_stats_kernel(x_ref, w_ref, y_ref, sum_ref, sq_ref):
    """Per-M-tile matmul (bf16 in, f32 acc) + per-channel sum / sum-of-squares
    accumulation across the whole grid (resident (1, OC) accumulators)."""
    y = jnp.dot(x_ref[...], w_ref[...], preferred_element_type=jnp.float32)
    y_ref[...] = y

    @pl.when(pl.program_id(0) == 0)
    def _():
        sum_ref[...] = jnp.zeros_like(sum_ref)
        sq_ref[...] = jnp.zeros_like(sq_ref)

    sum_ref[...] += jnp.sum(y, axis=0, keepdims=True)
    sq_ref[...] += jnp.sum(y * y, axis=0, keepdims=True)


def _bn_lrelu_kernel(y_ref, scale_ref, shift_ref, o_ref):
    """Affine batch-norm (precomputed scale/shift) + LeakyReLU(0.2), bf16 out."""
    z = y_ref[...] * scale_ref[...] + shift_ref[...]
    o_ref[...] = jnp.where(z >= 0, z, LEAK * z).astype(o_ref.dtype)


def _conv_bias_kernel(x_ref, w_ref, b_ref, o_ref):
    """Last layer: plain conv as matmul + bias (no BN, no activation)."""
    o_ref[...] = (
        jnp.dot(x_ref[...], w_ref[...], preferred_element_type=jnp.float32)
        + b_ref[...]
    )


# ---------------------------------------------------------------------------
# Glue: im2col (NHWC, (kh, kw, c) columns), tiling helpers
# ---------------------------------------------------------------------------
def _round_up(x, m):
    return ((x + m - 1) // m) * m


def _choose_tiling(m):
    """Return (tile_m, padded_m). tile_m is a multiple of 16 (bf16 sublanes)."""
    mp = _round_up(max(m, 1), 16)
    if mp <= TM_MAX:
        return mp, mp
    return TM_MAX, _round_up(m, TM_MAX)


def _im2col_nhwc(x, k, s):
    """x: (N, H, W, C) -> patches (N*OH*OW, k*k*C), rows in (n, oh, ow) order,
    columns in (kh, kw, c) order."""
    N, H, W, C = x.shape
    OH = (H - k) // s + 1
    OW = (W - k) // s + 1
    cols = []
    for i in range(k):
        for j in range(k):
            cols.append(x[:, i : i + s * OH : s, j : j + s * OW : s, :])
    p = jnp.stack(cols, axis=3)                      # (N, OH, OW, k*k, C)
    p = p.reshape(N * OH * OW, k * k * C)
    return p, OH, OW


def _weight_to_2d(weight):
    """PyTorch layout (OC, C, KH, KW) -> (KH*KW*C, OC), matching (kh, kw, c)
    im2col column order. Cast to bf16 for the MXU."""
    OC, C, KH, KW = weight.shape
    return weight.transpose(2, 3, 1, 0).reshape(KH * KW * C, OC).astype(jnp.bfloat16)


def _prep_patches(x, k, s):
    patches, OH, OW = _im2col_nhwc(x, k, s)
    M, K = patches.shape
    tm, Mp = _choose_tiling(M)
    patches = jnp.pad(patches, ((0, Mp - M), (0, 0))).astype(jnp.bfloat16)
    return patches, M, K, tm, Mp, OH, OW


# ---------------------------------------------------------------------------
# Layer wrappers
# ---------------------------------------------------------------------------
def _disc_block(x, weight, gamma, beta, *, k=4, s=2):
    """Conv(no bias; cancelled by BN) -> BatchNorm(train stats) -> LeakyReLU.
    x: (N, H, W, C) NHWC. Returns (N, OH, OW, OC) bf16 NHWC."""
    N = x.shape[0]
    OC = weight.shape[0]
    patches, M, K, tm, Mp, OH, OW = _prep_patches(x, k, s)
    w2d = _weight_to_2d(weight)
    grid = (Mp // tm,)

    # Pass 1: matmul + per-channel sum / sum-of-squares accumulation.
    y, ysum, ysq = pl.pallas_call(
        _matmul_stats_kernel,
        out_shape=(
            jax.ShapeDtypeStruct((Mp, OC), jnp.float32),
            jax.ShapeDtypeStruct((1, OC), jnp.float32),
            jax.ShapeDtypeStruct((1, OC), jnp.float32),
        ),
        grid_spec=pltpu.PrefetchScalarGridSpec(
            num_scalar_prefetch=0,
            grid=grid,
            in_specs=[
                pl.BlockSpec((tm, K), lambda i: (i, 0)),
                pl.BlockSpec((K, OC), lambda i: (0, 0)),
            ],
            out_specs=(
                pl.BlockSpec((tm, OC), lambda i: (i, 0)),
                pl.BlockSpec((1, OC), lambda i: (0, 0)),
                pl.BlockSpec((1, OC), lambda i: (0, 0)),
            ),
        ),
        compiler_params=pltpu.CompilerParams(
            dimension_semantics=("arbitrary",),        # resident accumulators
            vmem_limit_bytes=VMEM_LIMIT,
        ),
    )(patches, w2d)

    # Tiny finalize in plain JAX: biased variance (PyTorch train-mode BN).
    # Padded rows are exact zeros (no bias) so they contribute 0 to both sums;
    # divide by the real row count M.
    inv_m = 1.0 / M
    mean = ysum * inv_m
    var = ysq * inv_m - mean * mean
    inv_std = jax.lax.rsqrt(var + EPS)
    scale = gamma.reshape(1, OC).astype(jnp.float32) * inv_std
    shift = beta.reshape(1, OC).astype(jnp.float32) - mean * scale

    # Pass 2: normalize + LeakyReLU, emit bf16 for the next layer's matmul.
    out = pl.pallas_call(
        _bn_lrelu_kernel,
        out_shape=jax.ShapeDtypeStruct((Mp, OC), jnp.bfloat16),
        grid_spec=pltpu.PrefetchScalarGridSpec(
            num_scalar_prefetch=0,
            grid=grid,
            in_specs=[
                pl.BlockSpec((tm, OC), lambda i: (i, 0)),
                pl.BlockSpec((1, OC), lambda i: (0, 0)),
                pl.BlockSpec((1, OC), lambda i: (0, 0)),
            ],
            out_specs=pl.BlockSpec((tm, OC), lambda i: (i, 0)),
        ),
        compiler_params=pltpu.CompilerParams(
            dimension_semantics=("parallel",),          # megacore-shardable
            vmem_limit_bytes=VMEM_LIMIT,
        ),
    )(y, scale, shift)

    return out[:M].reshape(N, OH, OW, OC)


def _last_block(x, weight, bias, *, k=4, s=2):
    """Plain Conv2d (with bias). x: (N, H, W, C) NHWC -> (N, OH, OW, OC) f32."""
    N = x.shape[0]
    OC = weight.shape[0]
    patches, M, K, tm, Mp, OH, OW = _prep_patches(x, k, s)
    w2d = _weight_to_2d(weight)
    b2d = bias.reshape(1, OC).astype(jnp.float32)
    grid = (Mp // tm,)

    out = pl.pallas_call(
        _conv_bias_kernel,
        out_shape=jax.ShapeDtypeStruct((Mp, OC), jnp.float32),
        grid_spec=pltpu.PrefetchScalarGridSpec(
            num_scalar_prefetch=0,
            grid=grid,
            in_specs=[
                pl.BlockSpec((tm, K), lambda i: (i, 0)),
                pl.BlockSpec((K, OC), lambda i: (0, 0)),
                pl.BlockSpec((1, OC), lambda i: (0, 0)),
            ],
            out_specs=pl.BlockSpec((tm, OC), lambda i: (i, 0)),
        ),
        compiler_params=pltpu.CompilerParams(
            dimension_semantics=("parallel",),
            vmem_limit_bytes=VMEM_LIMIT,
        ),
    )(patches, w2d, b2d)

    return out[:M].reshape(N, OH, OW, OC)


def discriminator_forward(x_nchw, params):
    """x_nchw: (N, im_channels, H, W) float32 -> (N, 1) float32."""
    N = x_nchw.shape[0]
    x = jnp.transpose(x_nchw, (0, 2, 3, 1))            # to NHWC once
    # b1 / b2 are intentionally unused: conv bias is cancelled exactly by the
    # train-mode BatchNorm mean subtraction that follows.
    h = _disc_block(x, params["w1"], params["g1"], params["be1"])
    h = _disc_block(h, params["w2"], params["g2"], params["be2"])
    out = _last_block(h, params["w3"], params["b3"])
    return out.reshape(N, -1)


# ---------------------------------------------------------------------------
# Deterministic parameter init (mirrors weights_init: conv/BN weights ~ N(0, 0.02))
# ---------------------------------------------------------------------------
def init_params(key, hidden_dim=16, im_channels=1):
    ks = jax.random.split(key, 6)
    std = 0.02
    p = {}
    p["w1"] = std * jax.random.normal(ks[0], (hidden_dim, im_channels, 4, 4), jnp.float32)
    p["b1"] = jnp.zeros((hidden_dim,), jnp.float32)
    p["g1"] = std * jax.random.normal(ks[1], (hidden_dim,), jnp.float32)
    p["be1"] = jnp.zeros((hidden_dim,), jnp.float32)
    p["w2"] = std * jax.random.normal(ks[2], (2 * hidden_dim, hidden_dim, 4, 4), jnp.float32)
    p["b2"] = jnp.zeros((2 * hidden_dim,), jnp.float32)
    p["g2"] = std * jax.random.normal(ks[3], (2 * hidden_dim,), jnp.float32)
    p["be2"] = jnp.zeros((2 * hidden_dim,), jnp.float32)
    p["w3"] = std * jax.random.normal(ks[4], (1, 2 * hidden_dim, 4, 4), jnp.float32)
    p["b3"] = jnp.zeros((1,), jnp.float32)
    return p


if __name__ == "__main__":
    key = jax.random.PRNGKey(0)
    k_x, k_p = jax.random.split(key)

    # MNIST-like input: batch=2, 1 channel, 28x28 (28 -> 13 -> 5 -> 1 spatial).
    N, C, H, W = 2, 1, 28, 28
    x = jax.random.normal(k_x, (N, C, H, W), jnp.float32)
    params = init_params(k_p, hidden_dim=16, im_channels=C)

    fwd = jax.jit(discriminator_forward)
    out = jax.block_until_ready(fwd(x, params))

    assert out.shape == (N, 1), out.shape
    assert bool(jnp.all(jnp.isfinite(out)))
    print("KERNEL_OK")
</pallas_src>

<mosaic_0001>
module attributes {stable_mosaic.version = 11 : i64} {
  func.func @_matmul_stats_kernel(%arg0: i32, %arg1: memref<352x16xbf16, #tpu.memory_space<vmem>>, %arg2: memref<16x16xbf16, #tpu.memory_space<vmem>>, %arg3: memref<352x16xf32, #tpu.memory_space<vmem>>, %arg4: memref<1x16xf32, #tpu.memory_space<vmem>>, %arg5: memref<1x16xf32, #tpu.memory_space<vmem>>) attributes {dimension_semantics = [#tpu.dimension_semantics<arbitrary>], iteration_bounds = array<i64: 1>, scalar_prefetch = 0 : i64, scratch_operands = 0 : i64, tpu.core_type = #tpu.core_type<tc>, window_params = [{transform_indices = @transform_0, window_bounds = array<i64: 352, 16>}, {pipeline_mode = #tpu.pipeline_mode<synchronous>, transform_indices = @transform_1, window_bounds = array<i64: 16, 16>}, {transform_indices = @transform_2, window_bounds = array<i64: 352, 16>}, {pipeline_mode = #tpu.pipeline_mode<synchronous>, transform_indices = @transform_3, window_bounds = array<i64: 1, 16>}, {pipeline_mode = #tpu.pipeline_mode<synchronous>, transform_indices = @transform_4, window_bounds = array<i64: 1, 16>}]} {
    %c0 = arith.constant 0 : index
    %c0_0 = arith.constant 0 : index
    %0 = vector.load %arg1[%c0, %c0_0] : memref<352x16xbf16, #tpu.memory_space<vmem>>, vector<352x16xbf16>
    %c0_1 = arith.constant 0 : index
    %c0_2 = arith.constant 0 : index
    %1 = vector.load %arg2[%c0_1, %c0_2] : memref<16x16xbf16, #tpu.memory_space<vmem>>, vector<16x16xbf16>
    %cst = arith.constant dense<0.000000e+00> : vector<352x16xf32>
    %2 = tpu.matmul %0, %1, %cst {dimension_numbers = #tpu.dot_dimension_numbers<[1], [0], [0], [1], [0, 0, 1, 1], [], []>} : vector<352x16xbf16>, vector<16x16xbf16>, vector<352x16xf32> -> vector<352x16xf32>
    %c0_3 = arith.constant 0 : index
    %c0_4 = arith.constant 0 : index
    %3 = vector.load %arg3[%c0_3, %c0_4] : memref<352x16xf32, #tpu.memory_space<vmem>>, vector<352x16xf32>
    tpu.vector_store %arg3[%c0_3, %c0_4], %2 {strides = array<i32>} : memref<352x16xf32, #tpu.memory_space<vmem>>, vector<352x16xf32>,
    %c0_i32 = arith.constant 0 : i32
    %4 = arith.cmpi eq, %arg0, %c0_i32 : i32
    %5 = arith.extui %4 : i1 to i32
    %c0_i32_5 = arith.constant 0 : i32
    %6 = arith.cmpi ne, %5, %c0_i32_5 : i32
    scf.if %6 {
      %cst_16 = arith.constant 0.000000e+00 : f32
      %18 = vector.broadcast %cst_16 : f32 to vector<1x16xf32>
      %c0_17 = arith.constant 0 : index
      %c0_18 = arith.constant 0 : index
      %19 = vector.load %arg4[%c0_17, %c0_18] : memref<1x16xf32, #tpu.memory_space<vmem>>, vector<1x16xf32>
      tpu.vector_store %arg4[%c0_17, %c0_18], %18 {strides = array<i32>} : memref<1x16xf32, #tpu.memory_space<vmem>>, vector<1x16xf32>,
      %cst_19 = arith.constant 0.000000e+00 : f32
      %20 = vector.broadcast %cst_19 : f32 to vector<1x16xf32>
      %c0_20 = arith.constant 0 : index
      %c0_21 = arith.constant 0 : index
      %21 = vector.load %arg5[%c0_20, %c0_21] : memref<1x16xf32, #tpu.memory_space<vmem>>, vector<1x16xf32>
      tpu.vector_store %arg5[%c0_20, %c0_21], %20 {strides = array<i32>} : memref<1x16xf32, #tpu.memory_space<vmem>>, vector<1x16xf32>,
    } else {
    }
    %c0_6 = arith.constant 0 : index
    %c0_7 = arith.constant 0 : index
    %7 = vector.load %arg4[%c0_6, %c0_7] : memref<1x16xf32, #tpu.memory_space<vmem>>, vector<1x16xf32>
    %cst_8 = arith.constant dense<0.000000e+00> : vector<16xf32>
    %8 = vector.multi_reduction <add>, %2, %cst_8 [0] : vector<352x16xf32> to vector<16xf32>
    %9 = vector.shape_cast %8 : vector<16xf32> to vector<1x16xf32>
    %10 = arith.addf %7, %9 : vector<1x16xf32>
    %c0_9 = arith.constant 0 : index
    %c0_10 = arith.constant 0 : index
    %11 = vector.load %arg4[%c0_9, %c0_10] : memref<1x16xf32, #tpu.memory_space<vmem>>, vector<1x16xf32>
    tpu.vector_store %arg4[%c0_9, %c0_10], %10 {strides = array<i32>} : memref<1x16xf32, #tpu.memory_space<vmem>>, vector<1x16xf32>,
    %c0_11 = arith.constant 0 : index
    %c0_12 = arith.constant 0 : index
    %12 = vector.load %arg5[%c0_11, %c0_12] : memref<1x16xf32, #tpu.memory_space<vmem>>, vector<1x16xf32>
    %13 = arith.mulf %2, %2 : vector<352x16xf32>
    %cst_13 = arith.constant dense<0.000000e+00> : vector<16xf32>
    %14 = vector.multi_reduction <add>, %13, %cst_13 [0] : vector<352x16xf32> to vector<16xf32>
    %15 = vector.shape_cast %14 : vector<16xf32> to vector<1x16xf32>
    %16 = arith.addf %12, %15 : vector<1x16xf32>
    %c0_14 = arith.constant 0 : index
    %c0_15 = arith.constant 0 : index
    %17 = vector.load %arg5[%c0_14, %c0_15] : memref<1x16xf32, #tpu.memory_space<vmem>>, vector<1x16xf32>
    tpu.vector_store %arg5[%c0_14, %c0_15], %16 {strides = array<i32>} : memref<1x16xf32, #tpu.memory_space<vmem>>, vector<1x16xf32>,
    return
  }
  func.func @transform_0(%arg0: i32) -> (i32, i32) {
    %c0_i32 = arith.constant 0 : i32
    %c0_i32_0 = arith.constant 0 : i32
    return %arg0, %c0_i32 : i32, i32
  }
  func.func @transform_1(%arg0: i32) -> (i32, i32) {
    %c0_i32 = arith.constant 0 : i32
    %c0_i32_0 = arith.constant 0 : i32
    %c0_i32_1 = arith.constant 0 : i32
    return %c0_i32, %c0_i32_0 : i32, i32
  }
  func.func @transform_2(%arg0: i32) -> (i32, i32) {
    %c0_i32 = arith.constant 0 : i32
    %c0_i32_0 = arith.constant 0 : i32
    return %arg0, %c0_i32 : i32, i32
  }
  func.func @transform_3(%arg0: i32) -> (i32, i32) {
    %c0_i32 = arith.constant 0 : i32
    %c0_i32_0 = arith.constant 0 : i32
    %c0_i32_1 = arith.constant 0 : i32
    return %c0_i32, %c0_i32_0 : i32, i32
  }
  func.func @transform_4(%arg0: i32) -> (i32, i32) {
    %c0_i32 = arith.constant 0 : i32
    %c0_i32_0 = arith.constant 0 : i32
    %c0_i32_1 = arith.constant 0 : i32
    return %c0_i32, %c0_i32_0 : i32, i32
  }
}

module attributes {stable_mosaic.version = 11 : i64} {
  func.func @_bn_lrelu_kernel(%arg0: i32, %arg1: memref<352x16xf32, #tpu.memory_space<vmem>>, %arg2: memref<1x16xf32, #tpu.memory_space<vmem>>, %arg3: memref<1x16xf32, #tpu.memory_space<vmem>>, %arg4: memref<352x16xbf16, #tpu.memory_space<vmem>>) attributes {dimension_semantics = [#tpu.dimension_semantics<parallel>], iteration_bounds = array<i64: 1>, scalar_prefetch = 0 : i64, scratch_operands = 0 : i64, tpu.core_type = #tpu.core_type<tc>, window_params = [{transform_indices = @transform_0, window_bounds = array<i64: 352, 16>}, {pipeline_mode = #tpu.pipeline_mode<synchronous>, transform_indices = @transform_1, window_bounds = array<i64: 1, 16>}, {pipeline_mode = #tpu.pipeline_mode<synchronous>, transform_indices = @transform_2, window_bounds = array<i64: 1, 16>}, {transform_indices = @transform_3, window_bounds = array<i64: 352, 16>}]} {
    %c0 = arith.constant 0 : index
    %c0_0 = arith.constant 0 : index
    %0 = vector.load %arg1[%c0, %c0_0] : memref<352x16xf32, #tpu.memory_space<vmem>>, vector<352x16xf32>
    %c0_1 = arith.constant 0 : index
    %c0_2 = arith.constant 0 : index
    %1 = vector.load %arg2[%c0_1, %c0_2] : memref<1x16xf32, #tpu.memory_space<vmem>>, vector<1x16xf32>
    %2 = vector.broadcast %1 : vector<1x16xf32> to vector<352x16xf32>
    %3 = arith.mulf %0, %2 : vector<352x16xf32>
    %c0_3 = arith.constant 0 : index
    %c0_4 = arith.constant 0 : index
    %4 = vector.load %arg3[%c0_3, %c0_4] : memref<1x16xf32, #tpu.memory_space<vmem>>, vector<1x16xf32>
    %5 = vector.broadcast %4 : vector<1x16xf32> to vector<352x16xf32>
    %6 = arith.addf %3, %5 : vector<352x16xf32>
    %cst = arith.constant 0.000000e+00 : f32
    %7 = vector.broadcast %cst : f32 to vector<352x16xf32>
    %8 = arith.cmpf oge, %6, %7 : vector<352x16xf32>
    %cst_5 = arith.constant 2.000000e-01 : f32
    %9 = vector.broadcast %cst_5 : f32 to vector<352x16xf32>
    %10 = arith.mulf %9, %6 : vector<352x16xf32>
    %11 = arith.select %8, %6, %10 : vector<352x16xi1>, vector<352x16xf32>
    %12 = arith.truncf %11 : vector<352x16xf32> to vector<352x16xbf16>
    %c0_6 = arith.constant 0 : index
    %c0_7 = arith.constant 0 : index
    %13 = vector.load %arg4[%c0_6, %c0_7] : memref<352x16xbf16, #tpu.memory_space<vmem>>, vector<352x16xbf16>
    tpu.vector_store %arg4[%c0_6, %c0_7], %12 {strides = array<i32>} : memref<352x16xbf16, #tpu.memory_space<vmem>>, vector<352x16xbf16>,
    return
  }
  func.func @transform_0(%arg0: i32) -> (i32, i32) {
    %c0_i32 = arith.constant 0 : i32
    %c0_i32_0 = arith.constant 0 : i32
    return %arg0, %c0_i32 : i32, i32
  }
  func.func @transform_1(%arg0: i32) -> (i32, i32) {
    %c0_i32 = arith.constant 0 : i32
    %c0_i32_0 = arith.constant 0 : i32
    %c0_i32_1 = arith.constant 0 : i32
    return %c0_i32, %c0_i32_0 : i32, i32
  }
  func.func @transform_2(%arg0: i32) -> (i32, i32) {
    %c0_i32 = arith.constant 0 : i32
    %c0_i32_0 = arith.constant 0 : i32
    %c0_i32_1 = arith.constant 0 : i32
    return %c0_i32, %c0_i32_0 : i32, i32
  }
  func.func @transform_3(%arg0: i32) -> (i32, i32) {
    %c0_i32 = arith.constant 0 : i32
    %c0_i32_0 = arith.constant 0 : i32
    return %arg0, %c0_i32 : i32, i32
  }
}

module attributes {stable_mosaic.version = 11 : i64} {
  func.func @_matmul_stats_kernel(%arg0: i32, %arg1: memref<64x256xbf16, #tpu.memory_space<vmem>>, %arg2: memref<256x32xbf16, #tpu.memory_space<vmem>>, %arg3: memref<64x32xf32, #tpu.memory_space<vmem>>, %arg4: memref<1x32xf32, #tpu.memory_space<vmem>>, %arg5: memref<1x32xf32, #tpu.memory_space<vmem>>) attributes {dimension_semantics = [#tpu.dimension_semantics<arbitrary>], iteration_bounds = array<i64: 1>, scalar_prefetch = 0 : i64, scratch_operands = 0 : i64, tpu.core_type = #tpu.core_type<tc>, window_params = [{transform_indices = @transform_0, window_bounds = array<i64: 64, 256>}, {pipeline_mode = #tpu.pipeline_mode<synchronous>, transform_indices = @transform_1, window_bounds = array<i64: 256, 32>}, {transform_indices = @transform_2, window_bounds = array<i64: 64, 32>}, {pipeline_mode = #tpu.pipeline_mode<synchronous>, transform_indices = @transform_3, window_bounds = array<i64: 1, 32>}, {pipeline_mode = #tpu.pipeline_mode<synchronous>, transform_indices = @transform_4, window_bounds = array<i64: 1, 32>}]} {
    %c0 = arith.constant 0 : index
    %c0_0 = arith.constant 0 : index
    %0 = vector.load %arg1[%c0, %c0_0] : memref<64x256xbf16, #tpu.memory_space<vmem>>, vector<64x256xbf16>
    %c0_1 = arith.constant 0 : index
    %c0_2 = arith.constant 0 : index
    %1 = vector.load %arg2[%c0_1, %c0_2] : memref<256x32xbf16, #tpu.memory_space<vmem>>, vector<256x32xbf16>
    %cst = arith.constant dense<0.000000e+00> : vector<64x32xf32>
    %2 = tpu.matmul %0, %1, %cst {dimension_numbers = #tpu.dot_dimension_numbers<[1], [0], [0], [1], [0, 0, 1, 1], [], []>} : vector<64x256xbf16>, vector<256x32xbf16>, vector<64x32xf32> -> vector<64x32xf32>
    %c0_3 = arith.constant 0 : index
    %c0_4 = arith.constant 0 : index
    %3 = vector.load %arg3[%c0_3, %c0_4] : memref<64x32xf32, #tpu.memory_space<vmem>>, vector<64x32xf32>
    tpu.vector_store %arg3[%c0_3, %c0_4], %2 {strides = array<i32>} : memref<64x32xf32, #tpu.memory_space<vmem>>, vector<64x32xf32>,
    %c0_i32 = arith.constant 0 : i32
    %4 = arith.cmpi eq, %arg0, %c0_i32 : i32
    %5 = arith.extui %4 : i1 to i32
    %c0_i32_5 = arith.constant 0 : i32
    %6 = arith.cmpi ne, %5, %c0_i32_5 : i32
    scf.if %6 {
      %cst_16 = arith.constant 0.000000e+00 : f32
      %18 = vector.broadcast %cst_16 : f32 to vector<1x32xf32>
      %c0_17 = arith.constant 0 : index
      %c0_18 = arith.constant 0 : index
      %19 = vector.load %arg4[%c0_17, %c0_18] : memref<1x32xf32, #tpu.memory_space<vmem>>, vector<1x32xf32>
      tpu.vector_store %arg4[%c0_17, %c0_18], %18 {strides = array<i32>} : memref<1x32xf32, #tpu.memory_space<vmem>>, vector<1x32xf32>,
      %cst_19 = arith.constant 0.000000e+00 : f32
      %20 = vector.broadcast %cst_19 : f32 to vector<1x32xf32>
      %c0_20 = arith.constant 0 : index
      %c0_21 = arith.constant 0 : index
      %21 = vector.load %arg5[%c0_20, %c0_21] : memref<1x32xf32, #tpu.memory_space<vmem>>, vector<1x32xf32>
      tpu.vector_store %arg5[%c0_20, %c0_21], %20 {strides = array<i32>} : memref<1x32xf32, #tpu.memory_space<vmem>>, vector<1x32xf32>,
    } else {
    }
    %c0_6 = arith.constant 0 : index
    %c0_7 = arith.constant 0 : index
    %7 = vector.load %arg4[%c0_6, %c0_7] : memref<1x32xf32, #tpu.memory_space<vmem>>, vector<1x32xf32>
    %cst_8 = arith.constant dense<0.000000e+00> : vector<32xf32>
    %8 = vector.multi_reduction <add>, %2, %cst_8 [0] : vector<64x32xf32> to vector<32xf32>
    %9 = vector.shape_cast %8 : vector<32xf32> to vector<1x32xf32>
    %10 = arith.addf %7, %9 : vector<1x32xf32>
    %c0_9 = arith.constant 0 : index
    %c0_10 = arith.constant 0 : index
    %11 = vector.load %arg4[%c0_9, %c0_10] : memref<1x32xf32, #tpu.memory_space<vmem>>, vector<1x32xf32>
    tpu.vector_store %arg4[%c0_9, %c0_10], %10 {strides = array<i32>} : memref<1x32xf32, #tpu.memory_space<vmem>>, vector<1x32xf32>,
    %c0_11 = arith.constant 0 : index
    %c0_12 = arith.constant 0 : index
    %12 = vector.load %arg5[%c0_11, %c0_12] : memref<1x32xf32, #tpu.memory_space<vmem>>, vector<1x32xf32>
    %13 = arith.mulf %2, %2 : vector<64x32xf32>
    %cst_13 = arith.constant dense<0.000000e+00> : vector<32xf32>
    %14 = vector.multi_reduction <add>, %13, %cst_13 [0] : vector<64x32xf32> to vector<32xf32>
    %15 = vector.shape_cast %14 : vector<32xf32> to vector<1x32xf32>
    %16 = arith.addf %12, %15 : vector<1x32xf32>
    %c0_14 = arith.constant 0 : index
    %c0_15 = arith.constant 0 : index
    %17 = vector.load %arg5[%c0_14, %c0_15] : memref<1x32xf32, #tpu.memory_space<vmem>>, vector<1x32xf32>
    tpu.vector_store %arg5[%c0_14, %c0_15], %16 {strides = array<i32>} : memref<1x32xf32, #tpu.memory_space<vmem>>, vector<1x32xf32>,
    return
  }
  func.func @transform_0(%arg0: i32) -> (i32, i32) {
    %c0_i32 = arith.constant 0 : i32
    %c0_i32_0 = arith.constant 0 : i32
    return %arg0, %c0_i32 : i32, i32
  }
  func.func @transform_1(%arg0: i32) -> (i32, i32) {
    %c0_i32 = arith.constant 0 : i32
    %c0_i32_0 = arith.constant 0 : i32
    %c0_i32_1 = arith.constant 0 : i32
    return %c0_i32, %c0_i32_0 : i32, i32
  }
  func.func @transform_2(%arg0: i32) -> (i32, i32) {
    %c0_i32 = arith.constant 0 : i32
    %c0_i32_0 = arith.constant 0 : i32
    return %arg0, %c0_i32 : i32, i32
  }
  func.func @transform_3(%arg0: i32) -> (i32, i32) {
    %c0_i32 = arith.constant 0 : i32
    %c0_i32_0 = arith.constant 0 : i32
    %c0_i32_1 = arith.constant 0 : i32
    return %c0_i32, %c0_i32_0 : i32, i32
  }
  func.func @transform_4(%arg0: i32) -> (i32, i32) {
    %c0_i32 = arith.constant 0 : i32
    %c0_i32_0 = arith.constant 0 : i32
    %c0_i32_1 = arith.constant 0 : i32
    return %c0_i32, %c0_i32_0 : i32, i32
  }
}

module attributes {stable_mosaic.version = 11 : i64} {
  func.func @_bn_lrelu_kernel(%arg0: i32, %arg1: memref<64x32xf32, #tpu.memory_space<vmem>>, %arg2: memref<1x32xf32, #tpu.memory_space<vmem>>, %arg3: memref<1x32xf32, #tpu.memory_space<vmem>>, %arg4: memref<64x32xbf16, #tpu.memory_space<vmem>>) attributes {dimension_semantics = [#tpu.dimension_semantics<parallel>], iteration_bounds = array<i64: 1>, scalar_prefetch = 0 : i64, scratch_operands = 0 : i64, tpu.core_type = #tpu.core_type<tc>, window_params = [{transform_indices = @transform_0, window_bounds = array<i64: 64, 32>}, {pipeline_mode = #tpu.pipeline_mode<synchronous>, transform_indices = @transform_1, window_bounds = array<i64: 1, 32>}, {pipeline_mode = #tpu.pipeline_mode<synchronous>, transform_indices = @transform_2, window_bounds = array<i64: 1, 32>}, {transform_indices = @transform_3, window_bounds = array<i64: 64, 32>}]} {
    %c0 = arith.constant 0 : index
    %c0_0 = arith.constant 0 : index
    %0 = vector.load %arg1[%c0, %c0_0] : memref<64x32xf32, #tpu.memory_space<vmem>>, vector<64x32xf32>
    %c0_1 = arith.constant 0 : index
    %c0_2 = arith.constant 0 : index
    %1 = vector.load %arg2[%c0_1, %c0_2] : memref<1x32xf32, #tpu.memory_space<vmem>>, vector<1x32xf32>
    %2 = vector.broadcast %1 : vector<1x32xf32> to vector<64x32xf32>
    %3 = arith.mulf %0, %2 : vector<64x32xf32>
    %c0_3 = arith.constant 0 : index
    %c0_4 = arith.constant 0 : index
    %4 = vector.load %arg3[%c0_3, %c0_4] : memref<1x32xf32, #tpu.memory_space<vmem>>, vector<1x32xf32>
    %5 = vector.broadcast %4 : vector<1x32xf32> to vector<64x32xf32>
    %6 = arith.addf %3, %5 : vector<64x32xf32>
    %cst = arith.constant 0.000000e+00 : f32
    %7 = vector.broadcast %cst : f32 to vector<64x32xf32>
    %8 = arith.cmpf oge, %6, %7 : vector<64x32xf32>
    %cst_5 = arith.constant 2.000000e-01 : f32
    %9 = vector.broadcast %cst_5 : f32 to vector<64x32xf32>
    %10 = arith.mulf %9, %6 : vector<64x32xf32>
    %11 = arith.select %8, %6, %10 : vector<64x32xi1>, vector<64x32xf32>
    %12 = arith.truncf %11 : vector<64x32xf32> to vector<64x32xbf16>
    %c0_6 = arith.constant 0 : index
    %c0_7 = arith.constant 0 : index
    %13 = vector.load %arg4[%c0_6, %c0_7] : memref<64x32xbf16, #tpu.memory_space<vmem>>, vector<64x32xbf16>
    tpu.vector_store %arg4[%c0_6, %c0_7], %12 {strides = array<i32>} : memref<64x32xbf16, #tpu.memory_space<vmem>>, vector<64x32xbf16>,
    return
  }
  func.func @transform_0(%arg0: i32) -> (i32, i32) {
    %c0_i32 = arith.constant 0 : i32
    %c0_i32_0 = arith.constant 0 : i32
    return %arg0, %c0_i32 : i32, i32
  }
  func.func @transform_1(%arg0: i32) -> (i32, i32) {
    %c0_i32 = arith.constant 0 : i32
    %c0_i32_0 = arith.constant 0 : i32
    %c0_i32_1 = arith.constant 0 : i32
    return %c0_i32, %c0_i32_0 : i32, i32
  }
  func.func @transform_2(%arg0: i32) -> (i32, i32) {
    %c0_i32 = arith.constant 0 : i32
    %c0_i32_0 = arith.constant 0 : i32
    %c0_i32_1 = arith.constant 0 : i32
    return %c0_i32, %c0_i32_0 : i32, i32
  }
  func.func @transform_3(%arg0: i32) -> (i32, i32) {
    %c0_i32 = arith.constant 0 : i32
    %c0_i32_0 = arith.constant 0 : i32
    return %arg0, %c0_i32 : i32, i32
  }
}

module attributes {stable_mosaic.version = 11 : i64} {
  func.func @_conv_bias_kernel(%arg0: i32, %arg1: memref<16x512xbf16, #tpu.memory_space<vmem>>, %arg2: memref<512x1xbf16, #tpu.memory_space<vmem>>, %arg3: memref<1x1xf32, #tpu.memory_space<vmem>>, %arg4: memref<16x1xf32, #tpu.memory_space<vmem>>) attributes {dimension_semantics = [#tpu.dimension_semantics<parallel>], iteration_bounds = array<i64: 1>, scalar_prefetch = 0 : i64, scratch_operands = 0 : i64, tpu.core_type = #tpu.core_type<tc>, window_params = [{transform_indices = @transform_0, window_bounds = array<i64: 16, 512>}, {pipeline_mode = #tpu.pipeline_mode<synchronous>, transform_indices = @transform_1, window_bounds = array<i64: 512, 1>}, {pipeline_mode = #tpu.pipeline_mode<synchronous>, transform_indices = @transform_2, window_bounds = array<i64: 1, 1>}, {transform_indices = @transform_3, window_bounds = array<i64: 16, 1>}]} {
    %c0 = arith.constant 0 : index
    %c0_0 = arith.constant 0 : index
    %0 = vector.load %arg1[%c0, %c0_0] : memref<16x512xbf16, #tpu.memory_space<vmem>>, vector<16x512xbf16>
    %c0_1 = arith.constant 0 : index
    %c0_2 = arith.constant 0 : index
    %1 = vector.load %arg2[%c0_1, %c0_2] : memref<512x1xbf16, #tpu.memory_space<vmem>>, vector<512x1xbf16>
    %cst = arith.constant dense<0.000000e+00> : vector<16x1xf32>
    %2 = tpu.matmul %0, %1, %cst {dimension_numbers = #tpu.dot_dimension_numbers<[1], [0], [0], [1], [0, 0, 1, 1], [], []>} : vector<16x512xbf16>, vector<512x1xbf16>, vector<16x1xf32> -> vector<16x1xf32>
    %c0_3 = arith.constant 0 : index
    %c0_4 = arith.constant 0 : index
    %3 = vector.load %arg3[%c0_3, %c0_4] : memref<1x1xf32, #tpu.memory_space<vmem>>, vector<1x1xf32>
    %4 = vector.broadcast %3 : vector<1x1xf32> to vector<16x1xf32>
    %5 = arith.addf %2, %4 : vector<16x1xf32>
    %c0_5 = arith.constant 0 : index
    %c0_6 = arith.constant 0 : index
    %6 = vector.load %arg4[%c0_5, %c0_6] : memref<16x1xf32, #tpu.memory_space<vmem>>, vector<16x1xf32>
    tpu.vector_store %arg4[%c0_5, %c0_6], %5 {strides = array<i32>} : memref<16x1xf32, #tpu.memory_space<vmem>>, vector<16x1xf32>,
    return
  }
  func.func @transform_0(%arg0: i32) -> (i32, i32) {
    %c0_i32 = arith.constant 0 : i32
    %c0_i32_0 = arith.constant 0 : i32
    return %arg0, %c0_i32 : i32, i32
  }
  func.func @transform_1(%arg0: i32) -> (i32, i32) {
    %c0_i32 = arith.constant 0 : i32
    %c0_i32_0 = arith.constant 0 : i32
    %c0_i32_1 = arith.constant 0 : i32
    return %c0_i32, %c0_i32_0 : i32, i32
  }
  func.func @transform_2(%arg0: i32) -> (i32, i32) {
    %c0_i32 = arith.constant 0 : i32
    %c0_i32_0 = arith.constant 0 : i32
    %c0_i32_1 = arith.constant 0 : i32
    return %c0_i32, %c0_i32_0 : i32, i32
  }
  func.func @transform_3(%arg0: i32) -> (i32, i32) {
    %c0_i32 = arith.constant 0 : i32
    %c0_i32_0 = arith.constant 0 : i32
    return %arg0, %c0_i32 : i32, i32
  }
}

</mosaic_0001>

<llo_original>
// kernel: discriminator_forward.6
$region0: #{discriminator_forward.6}
  #allocation0 [shape = 'u32[]', space=smem, size = 0x4, offset = 0x4, fixed_abs, tag = 'smem constant byte address 0x4 - core index']
  #allocation1 [shape = 'u32[144,128]{1,0:T(1,128)}', space=vmem, size = 0x12000, scoped, tag = 'internal scratch']
  %s0 = inlined_call_operand.vmem [shape: f32[352,16], index: 0, kind: input, shape index: {}]
  %s1 = inlined_call_operand.vmem [shape: f32[1,16], index: 1, kind: input, shape index: {}]
  %s2 = inlined_call_operand.vmem [shape: f32[1,16], index: 2, kind: input, shape index: {}]
  %s3 = inlined_call_operand.vmem [shape: bf16[352,16], index: 3, kind: output, shape index: {}]
  %s4 = sld [smem:[#allocation0]]
  $region22: #{discriminator_forward.6} parent=0
    _
  %s6 = ssub.s32 1, %s4
  %s7 = scalar_select 0, %s6, %s4
  // Predicated region
  $region2: #{discriminator_forward.6} parent=0 // pred_check
    _
  $region3: #{discriminator_forward.6} parent=0 // pred_check_branch
    %9 = sbr.rel (0) target = $region5
  $region4: #{discriminator_forward.6} parent=0 // pred_region
    _
  $region5: #{discriminator_forward.6} parent=0 // pred_fallthru
    _
  // Predicated region
  $region6: #{discriminator_forward.6} parent=0 // pred_check
    _
  $region7: #{discriminator_forward.6} parent=0 // pred_check_branch
    %11 = sbr.rel (0) target = $region9
  $region8: #{discriminator_forward.6} parent=0 // pred_region
    _
  $region9: #{discriminator_forward.6} parent=0 // pred_fallthru
    _
  // Predicated region
  $region10: #{discriminator_forward.6} parent=0 // pred_check
    _
  $region11: #{discriminator_forward.6} parent=0 // pred_check_branch
    %13 = sbr.rel (0) target = $region13
  $region12: #{discriminator_forward.6} parent=0 // pred_region
    _
  $region13: #{discriminator_forward.6} parent=0 // pred_fallthru
    _
  %v14 = vld [vmem:[%s0] sm:$0xff]
  %v15 = vld [vmem:[%s0 + $0x8] sm:$0xff]
  %v16 = vld [vmem:[%s0 + $0x10] sm:$0xff]
  %v17 = vld [vmem:[%s0 + $0x18] sm:$0xff]
  %v18 = vld [vmem:[%s0 + $0x20] sm:$0xff]
  %v19 = vld [vmem:[%s0 + $0x28] sm:$0xff]
  %v20 = vld [vmem:[%s0 + $0x30] sm:$0xff]
  %v21 = vld [vmem:[%s0 + $0x38] sm:$0xff]
  %v22 = vld [vmem:[%s0 + $0x40] sm:$0xff]
  %v23 = vld [vmem:[%s0 + $0x48] sm:$0xff]
  %v24 = vld [vmem:[%s0 + $0x50] sm:$0xff]
  %v25 = vld [vmem:[%s0 + $0x58] sm:$0xff]
  %v26 = vld [vmem:[%s0 + $0x60] sm:$0xff]
  %v27 = vld [vmem:[%s0 + $0x68] sm:$0xff]
  %v28 = vld [vmem:[%s0 + $0x70] sm:$0xff]
  %v29 = vld [vmem:[%s0 + $0x78] sm:$0xff]
  %v30 = vld [vmem:[%s0 + $0x80] sm:$0xff]
  %v31 = vld [vmem:[%s0 + $0x88] sm:$0xff]
  %v32 = vld [vmem:[%s0 + $0x90] sm:$0xff]
  %v33 = vld [vmem:[%s0 + $0x98] sm:$0xff]
  %v34 = vld [vmem:[%s0 + $0xa0] sm:$0xff]
  %v35 = vld [vmem:[%s0 + $0xa8] sm:$0xff]
  %v36 = vld [vmem:[%s0 + $0xb0] sm:$0xff]
  %v37 = vld [vmem:[%s0 + $0xb8] sm:$0xff]
  %v38 = vld [vmem:[%s0 + $0xc0] sm:$0xff]
  %v39 = vld [vmem:[%s0 + $0xc8] sm:$0xff]
  %v40 = vld [vmem:[%s0 + $0xd0] sm:$0xff]
  %v41 = vld [vmem:[%s0 + $0xd8] sm:$0xff]
  %v42 = vld [vmem:[%s0 + $0xe0] sm:$0xff]
  %v43 = vld [vmem:[%s0 + $0xe8] sm:$0xff]
  %v44 = vld [vmem:[%s0 + $0xf0] sm:$0xff]
  %v45 = vld [vmem:[%s0 + $0xf8] sm:$0xff]
  %v46 = vld [vmem:[%s0 + $0x100] sm:$0xff]
  %v47 = vld [vmem:[%s0 + $0x108] sm:$0xff]
  %v48 = vld [vmem:[%s0 + $0x110] sm:$0xff]
  %v49 = vld [vmem:[%s0 + $0x118] sm:$0xff]
  %v50 = vld [vmem:[%s0 + $0x120] sm:$0xff]
  %v51 = vld [vmem:[%s0 + $0x128] sm:$0xff]
  %v52 = vld [vmem:[%s0 + $0x130] sm:$0xff]
  %v53 = vld [vmem:[%s0 + $0x138] sm:$0xff]
  %v54 = vld [vmem:[%s0 + $0x140] sm:$0xff]
  %v55 = vld [vmem:[%s0 + $0x148] sm:$0xff]
  %v56 = vld [vmem:[%s0 + $0x150] sm:$0xff]
  %v57 = vld [vmem:[%s0 + $0x158] sm:$0xff]
  %v58 = vld [vmem:[%s1] sm:$0x1]
  %v60 = vlaneseq
  %v61 = vshrl.u32 %v60, 7
  %v62 = vsub.s32 0, %v61
  %v63 = vrot.slane %v58, %v62
  %v65 = vmul.f32 %v14, %v63
  %v66 = vmul.f32 %v15, %v63
  %v67 = vmul.f32 %v16, %v63
  %v68 = vmul.f32 %v17, %v63
  %v69 = vmul.f32 %v18, %v63
  %v70 = vmul.f32 %v19, %v63
  %v71 = vmul.f32 %v20, %v63
  %v72 = vmul.f32 %v21, %v63
  %v73 = vmul.f32 %v22, %v63
  %v74 = vmul.f32 %v23, %v63
  %v75 = vmul.f32 %v24, %v63
  %v76 = vmul.f32 %v25, %v63
  %v77 = vmul.f32 %v26, %v63
  %v78 = vmul.f32 %v27, %v63
  %v79 = vmul.f32 %v28, %v63
  %v80 = vmul.f32 %v29, %v63
  %v81 = vmul.f32 %v30, %v63
  %v82 = vmul.f32 %v31, %v63
  %v83 = vmul.f32 %v32, %v63
  %v84 = vmul.f32 %v33, %v63
  %v85 = vmul.f32 %v34, %v63
  %v86 = vmul.f32 %v35, %v63
  %v87 = vmul.f32 %v36, %v63
  %v88 = vmul.f32 %v37, %v63
  %v89 = vmul.f32 %v38, %v63
  %v90 = vmul.f32 %v39, %v63
  %v91 = vmul.f32 %v40, %v63
  %v92 = vmul.f32 %v41, %v63
  %v93 = vmul.f32 %v42, %v63
  %v94 = vmul.f32 %v43, %v63
  %v95 = vmul.f32 %v44, %v63
  %v96 = vmul.f32 %v45, %v63
  %v97 = vmul.f32 %v46, %v63
  %v98 = vmul.f32 %v47, %v63
  %v99 = vmul.f32 %v48, %v63
  %v100 = vmul.f32 %v49, %v63
  %v101 = vmul.f32 %v50, %v63
  %v102 = vmul.f32 %v51, %v63
  %v103 = vmul.f32 %v52, %v63
  %v104 = vmul.f32 %v53, %v63
  %v105 = vmul.f32 %v54, %v63
  %v106 = vmul.f32 %v55, %v63
  %v107 = vmul.f32 %v56, %v63
  %v108 = vmul.f32 %v57, %v63
  %v109 = vld [vmem:[%s2] sm:$0x1]
  %v111 = vlaneseq
  %v112 = vshrl.u32 %v111, 7
  %v113 = vsub.s32 0, %v112
  %v114 = vrot.slane %v109, %v113
  %v116 = vadd.f32 %v65, %v114
  %v117 = vadd.f32 %v66, %v114
  %v118 = vadd.f32 %v67, %v114
  %v119 = vadd.f32 %v68, %v114
  %v120 = vadd.f32 %v69, %v114
  %v121 = vadd.f32 %v70, %v114
  %v122 = vadd.f32 %v71, %v114
  %v123 = vadd.f32 %v72, %v114
  %v124 = vadd.f32 %v73, %v114
  %v125 = vadd.f32 %v74, %v114
  %v126 = vadd.f32 %v75, %v114
  %v127 = vadd.f32 %v76, %v114
  %v128 = vadd.f32 %v77, %v114
  %v129 = vadd.f32 %v78, %v114
  %v130 = vadd.f32 %v79, %v114
  %v131 = vadd.f32 %v80, %v114
  %v132 = vadd.f32 %v81, %v114
  %v133 = vadd.f32 %v82, %v114
  %v134 = vadd.f32 %v83, %v114
  %v135 = vadd.f32 %v84, %v114
  %v136 = vadd.f32 %v85, %v114
  %v137 = vadd.f32 %v86, %v114
  %v138 = vadd.f32 %v87, %v114
  %v139 = vadd.f32 %v88, %v114
  %v140 = vadd.f32 %v89, %v114
  %v141 = vadd.f32 %v90, %v114
  %v142 = vadd.f32 %v91, %v114
  %v143 = vadd.f32 %v92, %v114
  %v144 = vadd.f32 %v93, %v114
  %v145 = vadd.f32 %v94, %v114
  %v146 = vadd.f32 %v95, %v114
  %v147 = vadd.f32 %v96, %v114
  %v148 = vadd.f32 %v97, %v114
  %v149 = vadd.f32 %v98, %v114
  %v150 = vadd.f32 %v99, %v114
  %v151 = vadd.f32 %v100, %v114
  %v152 = vadd.f32 %v101, %v114
  %v153 = vadd.f32 %v102, %v114
  %v154 = vadd.f32 %v103, %v114
  %v155 = vadd.f32 %v104, %v114
  %v156 = vadd.f32 %v105, %v114
  %v157 = vadd.f32 %v106, %v114
  %v158 = vadd.f32 %v107, %v114
  %v159 = vadd.f32 %v108, %v114
  %vm160 = vcmp.ge.f32.partialorder %v116, 0.0
  %vm161 = vcmp.ge.f32.partialorder %v117, 0.0
  %vm162 = vcmp.ge.f32.partialorder %v118, 0.0
  %vm163 = vcmp.ge.f32.partialorder %v119, 0.0
  %vm164 = vcmp.ge.f32.partialorder %v120, 0.0
  %vm165 = vcmp.ge.f32.partialorder %v121, 0.0
  %vm166 = vcmp.ge.f32.partialorder %v122, 0.0
  %vm167 = vcmp.ge.f32.partialorder %v123, 0.0
  %vm168 = vcmp.ge.f32.partialorder %v124, 0.0
  %vm169 = vcmp.ge.f32.partialorder %v125, 0.0
  %vm170 = vcmp.ge.f32.partialorder %v126, 0.0
  %vm171 = vcmp.ge.f32.partialorder %v127, 0.0
  %vm172 = vcmp.ge.f32.partialorder %v128, 0.0
  %vm173 = vcmp.ge.f32.partialorder %v129, 0.0
  %vm174 = vcmp.ge.f32.partialorder %v130, 0.0
  %vm175 = vcmp.ge.f32.partialorder %v131, 0.0
  %vm176 = vcmp.ge.f32.partialorder %v132, 0.0
  %vm177 = vcmp.ge.f32.partialorder %v133, 0.0
  %vm178 = vcmp.ge.f32.partialorder %v134, 0.0
  %vm179 = vcmp.ge.f32.partialorder %v135, 0.0
  %vm180 = vcmp.ge.f32.partialorder %v136, 0.0
  %vm181 = vcmp.ge.f32.partialorder %v137, 0.0
  %vm182 = vcmp.ge.f32.partialorder %v138, 0.0
  %vm183 = vcmp.ge.f32.partialorder %v139, 0.0
  %vm184 = vcmp.ge.f32.partialorder %v140, 0.0
  %vm185 = vcmp.ge.f32.partialorder %v141, 0.0
  %vm186 = vcmp.ge.f32.partialorder %v142, 0.0
  %vm187 = vcmp.ge.f32.partialorder %v143, 0.0
  %vm188 = vcmp.ge.f32.partialorder %v144, 0.0
  %vm189 = vcmp.ge.f32.partialorder %v145, 0.0
  %vm190 = vcmp.ge.f32.partialorder %v146, 0.0
  %vm191 = vcmp.ge.f32.partialorder %v147, 0.0
  %vm192 = vcmp.ge.f32.partialorder %v148, 0.0
  %vm193 = vcmp.ge.f32.partialorder %v149, 0.0
  %vm194 = vcmp.ge.f32.partialorder %v150, 0.0
  %vm195 = vcmp.ge.f32.partialorder %v151, 0.0
  %vm196 = vcmp.ge.f32.partialorder %v152, 0.0
  %vm197 = vcmp.ge.f32.partialorder %v153, 0.0
  %vm198 = vcmp.ge.f32.partialorder %v154, 0.0
  %vm199 = vcmp.ge.f32.partialorder %v155, 0.0
  %vm200 = vcmp.ge.f32.partialorder %v156, 0.0
  %vm201 = vcmp.ge.f32.partialorder %v157, 0.0
  %vm202 = vcmp.ge.f32.partialorder %v158, 0.0
  %vm203 = vcmp.ge.f32.partialorder %v159, 0.0
  %v204 = vmul.f32 %v116, 0.2
  %v205 = vmul.f32 %v117, 0.2
  %v206 = vmul.f32 %v118, 0.2
  %v207 = vmul.f32 %v119, 0.2
  %v208 = vmul.f32 %v120, 0.2
  %v209 = vmul.f32 %v121, 0.2
  %v210 = vmul.f32 %v122, 0.2
  %v211 = vmul.f32 %v123, 0.2
  %v212 = vmul.f32 %v124, 0.2
  %v213 = vmul.f32 %v125, 0.2
  %v214 = vmul.f32 %v126, 0.2
  %v215 = vmul.f32 %v127, 0.2
  %v216 = vmul.f32 %v128, 0.2
  %v217 = vmul.f32 %v129, 0.2
  %v218 = vmul.f32 %v130, 0.2
  %v219 = vmul.f32 %v131, 0.2
  %v220 = vmul.f32 %v132, 0.2
  %v221 = vmul.f32 %v133, 0.2
  %v222 = vmul.f32 %v134, 0.2
  %v223 = vmul.f32 %v135, 0.2
  %v224 = vmul.f32 %v136, 0.2
  %v225 = vmul.f32 %v137, 0.2
  %v226 = vmul.f32 %v138, 0.2
  %v227 = vmul.f32 %v139, 0.2
  %v228 = vmul.f32 %v140, 0.2
  %v229 = vmul.f32 %v141, 0.2
  %v230 = vmul.f32 %v142, 0.2
  %v231 = vmul.f32 %v143, 0.2
  %v232 = vmul.f32 %v144, 0.2
  %v233 = vmul.f32 %v145, 0.2
  %v234 = vmul.f32 %v146, 0.2
  %v235 = vmul.f32 %v147, 0.2
  %v236 = vmul.f32 %v148, 0.2
  %v237 = vmul.f32 %v149, 0.2
  %v238 = vmul.f32 %v150, 0.2
  %v239 = vmul.f32 %v151, 0.2
  %v240 = vmul.f32 %v152, 0.2
  %v241 = vmul.f32 %v153, 0.2
  %v242 = vmul.f32 %v154, 0.2
  %v243 = vmul.f32 %v155, 0.2
  %v244 = vmul.f32 %v156, 0.2
  %v245 = vmul.f32 %v157, 0.2
  %v246 = vmul.f32 %v158, 0.2
  %v247 = vmul.f32 %v159, 0.2
  %v248 = vsel %vm160, %v116, %v204
  %v249 = vsel %vm161, %v117, %v205
  %v250 = vsel %vm162, %v118, %v206
  %v251 = vsel %vm163, %v119, %v207
  %v252 = vsel %vm164, %v120, %v208
  %v253 = vsel %vm165, %v121, %v209
  %v254 = vsel %vm166, %v122, %v210
  %v255 = vsel %vm167, %v123, %v211
  %v256 = vsel %vm168, %v124, %v212
  %v257 = vsel %vm169, %v125, %v213
  %v258 = vsel %vm170, %v126, %v214
  %v259 = vsel %vm171, %v127, %v215
  %v260 = vsel %vm172, %v128, %v216
  %v261 = vsel %vm173, %v129, %v217
  %v262 = vsel %vm174, %v130, %v218
  %v263 = vsel %vm175, %v131, %v219
  %v264 = vsel %vm176, %v132, %v220
  %v265 = vsel %vm177, %v133, %v221
  %v266 = vsel %vm178, %v134, %v222
  %v267 = vsel %vm179, %v135, %v223
  %v268 = vsel %vm180, %v136, %v224
  %v269 = vsel %vm181, %v137, %v225
  %v270 = vsel %vm182, %v138, %v226
  %v271 = vsel %vm183, %v139, %v227
  %v272 = vsel %vm184, %v140, %v228
  %v273 = vsel %vm185, %v141, %v229
  %v274 = vsel %vm186, %v142, %v230
  %v275 = vsel %vm187, %v143, %v231
  %v276 = vsel %vm188, %v144, %v232
  %v277 = vsel %vm189, %v145, %v233
  %v278 = vsel %vm190, %v146, %v234
  %v279 = vsel %vm191, %v147, %v235
  %v280 = vsel %vm192, %v148, %v236
  %v281 = vsel %vm193, %v149, %v237
  %v282 = vsel %vm194, %v150, %v238
  %v283 = vsel %vm195, %v151, %v239
  %v284 = vsel %vm196, %v152, %v240
  %v285 = vsel %vm197, %v153, %v241
  %v286 = vsel %vm198, %v154, %v242
  %v287 = vsel %vm199, %v155, %v243
  %v288 = vsel %vm200, %v156, %v244
  %v289 = vsel %vm201, %v157, %v245
  %v290 = vsel %vm202, %v158, %v246
  %v291 = vsel %vm203, %v159, %v247
  %v292 = vpack.c.bf16 %v249, %v248
  %v293 = vpack.c.bf16 %v251, %v250
  %v294 = vpack.c.bf16 %v253, %v252
  %v295 = vpack.c.bf16 %v255, %v254
  %v296 = vpack.c.bf16 %v257, %v256
  %v297 = vpack.c.bf16 %v259, %v258
  %v298 = vpack.c.bf16 %v261, %v260
  %v299 = vpack.c.bf16 %v263, %v262
  %v300 = vpack.c.bf16 %v265, %v264
  %v301 = vpack.c.bf16 %v267, %v266
  %v302 = vpack.c.bf16 %v269, %v268
  %v303 = vpack.c.bf16 %v271, %v270
  %v304 = vpack.c.bf16 %v273, %v272
  %v305 = vpack.c.bf16 %v275, %v274
  %v306 = vpack.c.bf16 %v277, %v276
  %v307 = vpack.c.bf16 %v279, %v278
  %v308 = vpack.c.bf16 %v281, %v280
  %v309 = vpack.c.bf16 %v283, %v282
  %v310 = vpack.c.bf16 %v285, %v284
  %v311 = vpack.c.bf16 %v287, %v286
  %v312 = vpack.c.bf16 %v289, %v288
  %v313 = vpack.c.bf16 %v291, %v290
  %v336 = vunpack.c.l.b16 %v292
  %v337 = vunpack.c.h.b16 %v292
  %v338 = vunpack.c.l.b16 %v293
  %v339 = vunpack.c.h.b16 %v293
  %v340 = vunpack.c.l.b16 %v294
  %v341 = vunpack.c.h.b16 %v294
  %v342 = vunpack.c.l.b16 %v295
  %v343 = vunpack.c.h.b16 %v295
  %v344 = vunpack.c.l.b16 %v296
  %v345 = vunpack.c.h.b16 %v296
  %v346 = vunpack.c.l.b16 %v297
  %v347 = vunpack.c.h.b16 %v297
  %v348 = vunpack.c.l.b16 %v298
  %v349 = vunpack.c.h.b16 %v298
  %v350 = vunpack.c.l.b16 %v299
  %v351 = vunpack.c.h.b16 %v299
  %v352 = vunpack.c.l.b16 %v300
  %v353 = vunpack.c.h.b16 %v300
  %v354 = vunpack.c.l.b16 %v301
  %v355 = vunpack.c.h.b16 %v301
  %v356 = vunpack.c.l.b16 %v302
  %v357 = vunpack.c.h.b16 %v302
  %v358 = vunpack.c.l.b16 %v303
  %v359 = vunpack.c.h.b16 %v303
  %v360 = vunpack.c.l.b16 %v304
  %v361 = vunpack.c.h.b16 %v304
  %v362 = vunpack.c.l.b16 %v305
  %v363 = vunpack.c.h.b16 %v305
  %v364 = vunpack.c.l.b16 %v306
  %v365 = vunpack.c.h.b16 %v306
  %v366 = vunpack.c.l.b16 %v307
  %v367 = vunpack.c.h.b16 %v307
  %v368 = vunpack.c.l.b16 %v308
  %v369 = vunpack.c.h.b16 %v308
  %v370 = vunpack.c.l.b16 %v309
  %v371 = vunpack.c.h.b16 %v309
  %v372 = vunpack.c.l.b16 %v310
  %v373 = vunpack.c.h.b16 %v310
  %v374 = vunpack.c.l.b16 %v311
  %v375 = vunpack.c.h.b16 %v311
  %v376 = vunpack.c.l.b16 %v312
  %v377 = vunpack.c.h.b16 %v312
  %v378 = vunpack.c.l.b16 %v313
  %v379 = vunpack.c.h.b16 %v313
  %v380 = vpack.c.b16 %v336, %v336
  %v381 = vpack.c.b16 %v337, %v337
  %v382 = vpack.c.b16 %v338, %v338
  %v383 = vpack.c.b16 %v339, %v339
  %v384 = vpack.c.b16 %v340, %v340
  %v385 = vpack.c.b16 %v341, %v341
  %v386 = vpack.c.b16 %v342, %v342
  %v387 = vpack.c.b16 %v343, %v343
  %v388 = vpack.c.b16 %v344, %v344
  %v389 = vpack.c.b16 %v345, %v345
  %v390 = vpack.c.b16 %v346, %v346
  %v391 = vpack.c.b16 %v347, %v347
  %v392 = vpack.c.b16 %v348, %v348
  %v393 = vpack.c.b16 %v349, %v349
  %v394 = vpack.c.b16 %v350, %v350
  %v395 = vpack.c.b16 %v351, %v351
  %v396 = vpack.c.b16 %v352, %v352
  %v397 = vpack.c.b16 %v353, %v353
  %v398 = vpack.c.b16 %v354, %v354
  %v399 = vpack.c.b16 %v355, %v355
  %v400 = vpack.c.b16 %v356, %v356
  %v401 = vpack.c.b16 %v357, %v357
  %v402 = vpack.c.b16 %v358, %v358
  %v403 = vpack.c.b16 %v359, %v359
  %v404 = vpack.c.b16 %v360, %v360
  %v405 = vpack.c.b16 %v361, %v361
  %v406 = vpack.c.b16 %v362, %v362
  %v407 = vpack.c.b16 %v363, %v363
  %v408 = vpack.c.b16 %v364, %v364
  %v409 = vpack.c.b16 %v365, %v365
  %v410 = vpack.c.b16 %v366, %v366
  %v411 = vpack.c.b16 %v367, %v367
  %v412 = vpack.c.b16 %v368, %v368
  %v413 = vpack.c.b16 %v369, %v369
  %v414 = vpack.c.b16 %v370, %v370
  %v415 = vpack.c.b16 %v371, %v371
  %v416 = vpack.c.b16 %v372, %v372
  %v417 = vpack.c.b16 %v373, %v373
  %v418 = vpack.c.b16 %v374, %v374
  %v419 = vpack.c.b16 %v375, %v375
  %v420 = vpack.c.b16 %v376, %v376
  %v421 = vpack.c.b16 %v377, %v377
  %v422 = vpack.c.b16 %v378, %v378
  %v423 = vpack.c.b16 %v379, %v379
  %vm468 = vcmask 125952
  %469 = vst.msk [vmem:[%s3] sm:$0xf] %vm468, %v380
  %470 = vst.msk [vmem:[%s3 + $0x4] sm:$0xf] %vm468, %v381
  %471 = vst.msk [vmem:[%s3 + $0x8] sm:$0xf] %vm468, %v382
  %472 = vst.msk [vmem:[%s3 + $0xc] sm:$0xf] %vm468, %v383
  %473 = vst.msk [vmem:[%s3 + $0x10] sm:$0xf] %vm468, %v384
  %474 = vst.msk [vmem:[%s3 + $0x14] sm:$0xf] %vm468, %v385
  %475 = vst.msk [vmem:[%s3 + $0x18] sm:$0xf] %vm468, %v386
  %476 = vst.msk [vmem:[%s3 + $0x1c] sm:$0xf] %vm468, %v387
  %477 = vst.msk [vmem:[%s3 + $0x20] sm:$0xf] %vm468, %v388
  %478 = vst.msk [vmem:[%s3 + $0x24] sm:$0xf] %vm468, %v389
  %479 = vst.msk [vmem:[%s3 + $0x28] sm:$0xf] %vm468, %v390
  %480 = vst.msk [vmem:[%s3 + $0x2c] sm:$0xf] %vm468, %v391
  %481 = vst.msk [vmem:[%s3 + $0x30] sm:$0xf] %vm468, %v392
  %482 = vst.msk [vmem:[%s3 + $0x34] sm:$0xf] %vm468, %v393
  %483 = vst.msk [vmem:[%s3 + $0x38] sm:$0xf] %vm468, %v394
  %484 = vst.msk [vmem:[%s3 + $0x3c] sm:$0xf] %vm468, %v395
  %485 = vst.msk [vmem:[%s3 + $0x40] sm:$0xf] %vm468, %v396
  %486 = vst.msk [vmem:[%s3 + $0x44] sm:$0xf] %vm468, %v397
  %487 = vst.msk [vmem:[%s3 + $0x48] sm:$0xf] %vm468, %v398
  %488 = vst.msk [vmem:[%s3 + $0x4c] sm:$0xf] %vm468, %v399
  %489 = vst.msk [vmem:[%s3 + $0x50] sm:$0xf] %vm468, %v400
  %490 = vst.msk [vmem:[%s3 + $0x54] sm:$0xf] %vm468, %v401
  %491 = vst.msk [vmem:[%s3 + $0x58] sm:$0xf] %vm468, %v402
  %492 = vst.msk [vmem:[%s3 + $0x5c] sm:$0xf] %vm468, %v403
  %493 = vst.msk [vmem:[%s3 + $0x60] sm:$0xf] %vm468, %v404
  %494 = vst.msk [vmem:[%s3 + $0x64] sm:$0xf] %vm468, %v405
  %495 = vst.msk [vmem:[%s3 + $0x68] sm:$0xf] %vm468, %v406
  %496 = vst.msk [vmem:[%s3 + $0x6c] sm:$0xf] %vm468, %v407
  %497 = vst.msk [vmem:[%s3 + $0x70] sm:$0xf] %vm468, %v408
  %498 = vst.msk [vmem:[%s3 + $0x74] sm:$0xf] %vm468, %v409
  %499 = vst.msk [vmem:[%s3 + $0x78] sm:$0xf] %vm468, %v410
  %500 = vst.msk [vmem:[%s3 + $0x7c] sm:$0xf] %vm468, %v411
  %501 = vst.msk [vmem:[%s3 + $0x80] sm:$0xf] %vm468, %v412
  %502 = vst.msk [vmem:[%s3 + $0x84] sm:$0xf] %vm468, %v413
  %503 = vst.msk [vmem:[%s3 + $0x88] sm:$0xf] %vm468, %v414
  %504 = vst.msk [vmem:[%s3 + $0x8c] sm:$0xf] %vm468, %v415
  %505 = vst.msk [vmem:[%s3 + $0x90] sm:$0xf] %vm468, %v416
  %506 = vst.msk [vmem:[%s3 + $0x94] sm:$0xf] %vm468, %v417
  %507 = vst.msk [vmem:[%s3 + $0x98] sm:$0xf] %vm468, %v418
  %508 = vst.msk [vmem:[%s3 + $0x9c] sm:$0xf] %vm468, %v419
  %509 = vst.msk [vmem:[%s3 + $0xa0] sm:$0xf] %vm468, %v420
  %510 = vst.msk [vmem:[%s3 + $0xa4] sm:$0xf] %vm468, %v421
  %511 = vst.msk [vmem:[%s3 + $0xa8] sm:$0xf] %vm468, %v422
  %512 = vst.msk [vmem:[%s3 + $0xac] sm:$0xf] %vm468, %v423
  // Predicated region
  $region14: #{discriminator_forward.6} parent=0 // pred_check
    _
  $region15: #{discriminator_forward.6} parent=0 // pred_check_branch
    %514 = sbr.rel (0) target = $region17
  $region16: #{discriminator_forward.6} parent=0 // pred_region
    _
  $region17: #{discriminator_forward.6} parent=0 // pred_fallthru
    _
  // Predicated region
  $region18: #{discriminator_forward.6} parent=0 // pred_check
    _
  $region19: #{discriminator_forward.6} parent=0 // pred_check_branch
    %516 = sbr.rel (0) target = $region21
  $region20: #{discriminator_forward.6} parent=0 // pred_region
    _
  $region21: #{discriminator_forward.6} parent=0 // pred_fallthru
    _

// kernel: discriminator_forward.5
$region0: #{discriminator_forward.5}
  #allocation0 [shape = 'u32[]', space=smem, size = 0x4, offset = 0x4, fixed_abs, tag = 'smem constant byte address 0x4 - core index']
  #allocation1 [shape = 'u32[144,128]{1,0:T(1,128)}', space=vmem, size = 0x12000, scoped, tag = 'internal scratch']
  %s0 = inlined_call_operand.vmem [shape: bf16[352,16], index: 0, kind: input, shape index: {}]
  %s1 = inlined_call_operand.vmem [shape: bf16[16,16], index: 1, kind: input, shape index: {}]
  %s2 = inlined_call_operand.vmem [shape: f32[352,16], index: 2, kind: output, shape index: {0}]
  %s3 = inlined_call_operand.vmem [shape: f32[1,16], index: 3, kind: output, shape index: {1}]
  %s4 = inlined_call_operand.vmem [shape: f32[1,16], index: 4, kind: output, shape index: {2}]
  %5 = xla_tuple %s2, %s3, %s4
  %s6 = sld [smem:[#allocation0]]
  $region38: #{discriminator_forward.5} parent=0
    _
  %s8 = ssub.s32 1, %s6
  %s9 = scalar_select 0, %s8, %s6
  // Predicated region
  $region2: #{discriminator_forward.5} parent=0 // pred_check
    _
  $region3: #{discriminator_forward.5} parent=0 // pred_check_branch
    %11 = sbr.rel (0) target = $region5
  $region4: #{discriminator_forward.5} parent=0 // pred_region
    _
  $region5: #{discriminator_forward.5} parent=0 // pred_fallthru
    _
  // Predicated region
  $region6: #{discriminator_forward.5} parent=0 // pred_check
    _
  $region7: #{discriminator_forward.5} parent=0 // pred_check_branch
    %13 = sbr.rel (0) target = $region9
  $region8: #{discriminator_forward.5} parent=0 // pred_region
    _
  $region9: #{discriminator_forward.5} parent=0 // pred_fallthru
    _
  %v15 = vld [vmem:[%s0] sm:$0xf]
  %v16 = vld [vmem:[%s0 + $0x4] sm:$0xf]
  %v17 = vld [vmem:[%s0 + $0x8] sm:$0xf]
  %v18 = vld [vmem:[%s0 + $0xc] sm:$0xf]
  %v19 = vld [vmem:[%s0 + $0x10] sm:$0xf]
  %v20 = vld [vmem:[%s0 + $0x14] sm:$0xf]
  %v21 = vld [vmem:[%s0 + $0x18] sm:$0xf]
  %v22 = vld [vmem:[%s0 + $0x1c] sm:$0xf]
  %v23 = vld [vmem:[%s0 + $0x20] sm:$0xf]
  %v24 = vld [vmem:[%s0 + $0x24] sm:$0xf]
  %v25 = vld [vmem:[%s0 + $0x28] sm:$0xf]
  %v26 = vld [vmem:[%s0 + $0x2c] sm:$0xf]
  %v27 = vld [vmem:[%s0 + $0x30] sm:$0xf]
  %v28 = vld [vmem:[%s0 + $0x34] sm:$0xf]
  %v29 = vld [vmem:[%s0 + $0x38] sm:$0xf]
  %v30 = vld [vmem:[%s0 + $0x3c] sm:$0xf]
  %v31 = vld [vmem:[%s0 + $0x40] sm:$0xf]
  %v32 = vld [vmem:[%s0 + $0x44] sm:$0xf]
  %v33 = vld [vmem:[%s0 + $0x48] sm:$0xf]
  %v34 = vld [vmem:[%s0 + $0x4c] sm:$0xf]
  %v35 = vld [vmem:[%s0 + $0x50] sm:$0xf]
  %v36 = vld [vmem:[%s0 + $0x54] sm:$0xf]
  %v37 = vld [vmem:[%s0 + $0x58] sm:$0xf]
  %v38 = vld [vmem:[%s0 + $0x5c] sm:$0xf]
  %v39 = vld [vmem:[%s0 + $0x60] sm:$0xf]
  %v40 = vld [vmem:[%s0 + $0x64] sm:$0xf]
  %v41 = vld [vmem:[%s0 + $0x68] sm:$0xf]
  %v42 = vld [vmem:[%s0 + $0x6c] sm:$0xf]
  %v43 = vld [vmem:[%s0 + $0x70] sm:$0xf]
  %v44 = vld [vmem:[%s0 + $0x74] sm:$0xf]
  %v45 = vld [vmem:[%s0 + $0x78] sm:$0xf]
  %v46 = vld [vmem:[%s0 + $0x7c] sm:$0xf]
  %v47 = vld [vmem:[%s0 + $0x80] sm:$0xf]
  %v48 = vld [vmem:[%s0 + $0x84] sm:$0xf]
  %v49 = vld [vmem:[%s0 + $0x88] sm:$0xf]
  %v50 = vld [vmem:[%s0 + $0x8c] sm:$0xf]
  %v51 = vld [vmem:[%s0 + $0x90] sm:$0xf]
  %v52 = vld [vmem:[%s0 + $0x94] sm:$0xf]
  %v53 = vld [vmem:[%s0 + $0x98] sm:$0xf]
  %v54 = vld [vmem:[%s0 + $0x9c] sm:$0xf]
  %v55 = vld [vmem:[%s0 + $0xa0] sm:$0xf]
  %v56 = vld [vmem:[%s0 + $0xa4] sm:$0xf]
  %v57 = vld [vmem:[%s0 + $0xa8] sm:$0xf]
  %v58 = vld [vmem:[%s0 + $0xac] sm:$0xf]
  %v59 = vld [vmem:[%s1] sm:$0xf]
  %v60 = vld [vmem:[%s1 + $0x4] sm:$0xf]
  %v105 = vunpack.c.l.b16 %v15
  %v106 = vunpack.c.l.b16 %v16
  %v107 = vunpack.c.l.b16 %v17
  %v108 = vunpack.c.l.b16 %v18
  %v109 = vunpack.c.l.b16 %v19
  %v110 = vunpack.c.l.b16 %v20
  %v111 = vunpack.c.l.b16 %v21
  %v112 = vunpack.c.l.b16 %v22
  %v113 = vunpack.c.l.b16 %v23
  %v114 = vunpack.c.l.b16 %v24
  %v115 = vunpack.c.l.b16 %v25
  %v116 = vunpack.c.l.b16 %v26
  %v117 = vunpack.c.l.b16 %v27
  %v118 = vunpack.c.l.b16 %v28
  %v119 = vunpack.c.l.b16 %v29
  %v120 = vunpack.c.l.b16 %v30
  %v121 = vunpack.c.l.b16 %v31
  %v122 = vunpack.c.l.b16 %v32
  %v123 = vunpack.c.l.b16 %v33
  %v124 = vunpack.c.l.b16 %v34
  %v125 = vunpack.c.l.b16 %v35
  %v126 = vunpack.c.l.b16 %v36
  %v127 = vunpack.c.l.b16 %v37
  %v128 = vunpack.c.l.b16 %v38
  %v129 = vunpack.c.l.b16 %v39
  %v130 = vunpack.c.l.b16 %v40
  %v131 = vunpack.c.l.b16 %v41
  %v132 = vunpack.c.l.b16 %v42
  %v133 = vunpack.c.l.b16 %v43
  %v134 = vunpack.c.l.b16 %v44
  %v135 = vunpack.c.l.b16 %v45
  %v136 = vunpack.c.l.b16 %v46
  %v137 = vunpack.c.l.b16 %v47
  %v138 = vunpack.c.l.b16 %v48
  %v139 = vunpack.c.l.b16 %v49
  %v140 = vunpack.c.l.b16 %v50
  %v141 = vunpack.c.l.b16 %v51
  %v142 = vunpack.c.l.b16 %v52
  %v143 = vunpack.c.l.b16 %v53
  %v144 = vunpack.c.l.b16 %v54
  %v145 = vunpack.c.l.b16 %v55
  %v146 = vunpack.c.l.b16 %v56
  %v147 = vunpack.c.l.b16 %v57
  %v148 = vunpack.c.l.b16 %v58
  %v149 = vpack.c.b16 %v106, %v105
  %v150 = vpack.c.b16 %v108, %v107
  %v151 = vpack.c.b16 %v110, %v109
  %v152 = vpack.c.b16 %v112, %v111
  %v153 = vpack.c.b16 %v114, %v113
  %v154 = vpack.c.b16 %v116, %v115
  %v155 = vpack.c.b16 %v118, %v117
  %v156 = vpack.c.b16 %v120, %v119
  %v157 = vpack.c.b16 %v122, %v121
  %v158 = vpack.c.b16 %v124, %v123
  %v159 = vpack.c.b16 %v126, %v125
  %v160 = vpack.c.b16 %v128, %v127
  %v161 = vpack.c.b16 %v130, %v129
  %v162 = vpack.c.b16 %v132, %v131
  %v163 = vpack.c.b16 %v134, %v133
  %v164 = vpack.c.b16 %v136, %v135
  %v165 = vpack.c.b16 %v138, %v137
  %v166 = vpack.c.b16 %v140, %v139
  %v167 = vpack.c.b16 %v142, %v141
  %v168 = vpack.c.b16 %v144, %v143
  %v169 = vpack.c.b16 %v146, %v145
  %v170 = vpack.c.b16 %v148, %v147
  %v173 = vunpack.c.l.b16 %v59
  %v174 = vunpack.c.l.b16 %v60
  %v175 = vpack.c.b16 %v174, %v173
  %vm177 = vcmask 130048
  %v179 = vsel %vm177, %v149, 0
  %v182 = vsel %vm177, %v150, 0
  %v185 = vsel %vm177, %v151, 0
  %v188 = vsel %vm177, %v152, 0
  %v191 = vsel %vm177, %v153, 0
  %v194 = vsel %vm177, %v154, 0
  %v197 = vsel %vm177, %v155, 0
  %v200 = vsel %vm177, %v156, 0
  %v203 = vsel %vm177, %v157, 0
  %v206 = vsel %vm177, %v158, 0
  %v209 = vsel %vm177, %v159, 0
  %v212 = vsel %vm177, %v160, 0
  %v215 = vsel %vm177, %v161, 0
  %v218 = vsel %vm177, %v162, 0
  %v221 = vsel %vm177, %v163, 0
  %v224 = vsel %vm177, %v164, 0
  %v227 = vsel %vm177, %v165, 0
  %v230 = vsel %vm177, %v166, 0
  %v233 = vsel %vm177, %v167, 0
  %v236 = vsel %vm177, %v168, 0
  %v239 = vsel %vm177, %v169, 0
  %v242 = vsel %vm177, %v170, 0
  %244 = vmatprep.subr.bf16.mxu0 0
  %245 = vmatpush1.bf16.msra.mxu0 0
  %246 = vmatprep.subr.bf16.mxu0 0
  %247 = vmatpush1.bf16.msra.mxu0 0
  %248 = vmatprep.subr.bf16.mxu0 0
  %249 = vmatpush1.bf16.msra.mxu0 0
  %250 = vmatprep.subr.bf16.mxu0 0
  %251 = vmatpush1.bf16.msra.mxu0 0
  %252 = vmatprep.subr.bf16.mxu0 0
  %253 = vmatpush1.bf16.msra.mxu0 0
  %254 = vmatprep.subr.bf16.mxu0 0
  %255 = vmatpush1.bf16.msra.mxu0 0
  %256 = vmatprep.subr.bf16.mxu0 0
  %257 = vmatpush1.bf16.msra.mxu0 0
  %258 = vmatprep.subr.bf16.mxu0 0
  %259 = vmatpush1.bf16.msra.mxu0 %v175
  %260 = vmatprep.subr.bf16.mxu0 0
  %261 = vmatpush2.bf16.msra.mxu0 0
  %262 = vmatprep.subr.bf16.mxu0 0
  %263 = vmatpush2.bf16.msra.mxu0 0
  %264 = vmatprep.subr.bf16.mxu0 0
  %265 = vmatpush2.bf16.msra.mxu0 0
  %266 = vmatprep.subr.bf16.mxu0 0
  %267 = vmatpush2.bf16.msra.mxu0 0
  %268 = vmatprep.subr.bf16.mxu0 0
  %269 = vmatpush2.bf16.msra.mxu0 0
  %270 = vmatprep.subr.bf16.mxu0 0
  %271 = vmatpush2.bf16.msra.mxu0 0
  %272 = vmatprep.subr.bf16.mxu0 0
  %273 = vmatpush2.bf16.msra.mxu0 0
  %274 = vmatprep.subr.bf16.mxu0 0
  %275 = vmatpush2.bf16.msra.mxu0 0
  %276 = vmatprep.mubr.bf16.mxu0 0
  %277 = vmatmul.mubr.bf16.gmra.mxu0 %v179
  %v278 = vpop.f32.mrf.mxu0
  %v279 = vadd.f32 0.0, %v278
  %v280 = vpop.f32.mrf.mxu0
  %v281 = vpop.f32.mrf.mxu0
  %v282 = vadd.f32 0.0, %v281
  %v283 = vpop.f32.mrf.mxu0
  %284 = vmatprep.mubr.bf16.mxu0 0
  %285 = vmatmul.mubr.bf16.gmra.mxu0 %v182
  %v286 = vpop.f32.mrf.mxu0
  %v287 = vadd.f32 0.0, %v286
  %v288 = vpop.f32.mrf.mxu0
  %v289 = vpop.f32.mrf.mxu0
  %v290 = vadd.f32 0.0, %v289
  %v291 = vpop.f32.mrf.mxu0
  %292 = vmatprep.mubr.bf16.mxu0 0
  %293 = vmatmul.mubr.bf16.gmra.mxu0 %v185
  %v294 = vpop.f32.mrf.mxu0
  %v295 = vadd.f32 0.0, %v294
  %v296 = vpop.f32.mrf.mxu0
  %v297 = vpop.f32.mrf.mxu0
  %v298 = vadd.f32 0.0, %v297
  %v299 = vpop.f32.mrf.mxu0
  %300 = vmatprep.mubr.bf16.mxu0 0
  %301 = vmatmul.mubr.bf16.gmra.mxu0 %v188
  %v302 = vpop.f32.mrf.mxu0
  %v303 = vadd.f32 0.0, %v302
  %v304 = vpop.f32.mrf.mxu0
  %v305 = vpop.f32.mrf.mxu0
  %v306 = vadd.f32 0.0, %v305
  %v307 = vpop.f32.mrf.mxu0
  %308 = vmatprep.mubr.bf16.mxu0 0
  %309 = vmatmul.mubr.bf16.gmra.mxu0 %v191
  %v310 = vpop.f32.mrf.mxu0
  %v311 = vadd.f32 0.0, %v310
  %v312 = vpop.f32.mrf.mxu0
  %v313 = vpop.f32.mrf.mxu0
  %v314 = vadd.f32 0.0, %v313
  %v315 = vpop.f32.mrf.mxu0
  %316 = vmatprep.mubr.bf16.mxu0 0
  %317 = vmatmul.mubr.bf16.gmra.mxu0 %v194
  %v318 = vpop.f32.mrf.mxu0
  %v319 = vadd.f32 0.0, %v318
  %v320 = vpop.f32.mrf.mxu0
  %v321 = vpop.f32.mrf.mxu0
  %v322 = vadd.f32 0.0, %v321
  %v323 = vpop.f32.mrf.mxu0
  %324 = vmatprep.mubr.bf16.mxu0 0
  %325 = vmatmul.mubr.bf16.gmra.mxu0 %v197
  %v326 = vpop.f32.mrf.mxu0
  %v327 = vadd.f32 0.0, %v326
  %v328 = vpop.f32.mrf.mxu0
  %v329 = vpop.f32.mrf.mxu0
  %v330 = vadd.f32 0.0, %v329
  %v331 = vpop.f32.mrf.mxu0
  %332 = vmatprep.mubr.bf16.mxu0 0
  %333 = vmatmul.mubr.bf16.gmra.mxu0 %v200
  %v334 = vpop.f32.mrf.mxu0
  %v335 = vadd.f32 0.0, %v334
  %v336 = vpop.f32.mrf.mxu0
  %v337 = vpop.f32.mrf.mxu0
  %v338 = vadd.f32 0.0, %v337
  %v339 = vpop.f32.mrf.mxu0
  %340 = vmatprep.mubr.bf16.mxu0 0
  %341 = vmatmul.mubr.bf16.gmra.mxu0 %v203
  %v342 = vpop.f32.mrf.mxu0
  %v343 = vadd.f32 0.0, %v342
  %v344 = vpop.f32.mrf.mxu0
  %v345 = vpop.f32.mrf.mxu0
  %v346 = vadd.f32 0.0, %v345
  %v347 = vpop.f32.mrf.mxu0
  %348 = vmatprep.mubr.bf16.mxu0 0
  %349 = vmatmul.mubr.bf16.gmra.mxu0 %v206
  %v350 = vpop.f32.mrf.mxu0
  %v351 = vadd.f32 0.0, %v350
  %v352 = vpop.f32.mrf.mxu0
  %v353 = vpop.f32.mrf.mxu0
  %v354 = vadd.f32 0.0, %v353
  %v355 = vpop.f32.mrf.mxu0
  %356 = vmatprep.mubr.bf16.mxu0 0
  %357 = vmatmul.mubr.bf16.gmra.mxu0 %v209
  %v358 = vpop.f32.mrf.mxu0
  %v359 = vadd.f32 0.0, %v358
  %v360 = vpop.f32.mrf.mxu0
  %v361 = vpop.f32.mrf.mxu0
  %v362 = vadd.f32 0.0, %v361
  %v363 = vpop.f32.mrf.mxu0
  %364 = vmatprep.mubr.bf16.mxu0 0
  %365 = vmatmul.mubr.bf16.gmra.mxu0 %v212
  %v366 = vpop.f32.mrf.mxu0
  %v367 = vadd.f32 0.0, %v366
  %v368 = vpop.f32.mrf.mxu0
  %v369 = vpop.f32.mrf.mxu0
  %v370 = vadd.f32 0.0, %v369
  %v371 = vpop.f32.mrf.mxu0
  %372 = vmatprep.mubr.bf16.mxu0 0
  %373 = vmatmul.mubr.bf16.gmra.mxu0 %v215
  %v374 = vpop.f32.mrf.mxu0
  %v375 = vadd.f32 0.0, %v374
  %v376 = vpop.f32.mrf.mxu0
  %v377 = vpop.f32.mrf.mxu0
  %v378 = vadd.f32 0.0, %v377
  %v379 = vpop.f32.mrf.mxu0
  %380 = vmatprep.mubr.bf16.mxu0 0
  %381 = vmatmul.mubr.bf16.gmra.mxu0 %v218
  %v382 = vpop.f32.mrf.mxu0
  %v383 = vadd.f32 0.0, %v382
  %v384 = vpop.f32.mrf.mxu0
  %v385 = vpop.f32.mrf.mxu0
  %v386 = vadd.f32 0.0, %v385
  %v387 = vpop.f32.mrf.mxu0
  %388 = vmatprep.mubr.bf16.mxu0 0
  %389 = vmatmul.mubr.bf16.gmra.mxu0 %v221
  %v390 = vpop.f32.mrf.mxu0
  %v391 = vadd.f32 0.0, %v390
  %v392 = vpop.f32.mrf.mxu0
  %v393 = vpop.f32.mrf.mxu0
  %v394 = vadd.f32 0.0, %v393
  %v395 = vpop.f32.mrf.mxu0
  %396 = vmatprep.mubr.bf16.mxu0 0
  %397 = vmatmul.mubr.bf16.gmra.mxu0 %v224
  %v398 = vpop.f32.mrf.mxu0
  %v399 = vadd.f32 0.0, %v398
  %v400 = vpop.f32.mrf.mxu0
  %v401 = vpop.f32.mrf.mxu0
  %v402 = vadd.f32 0.0, %v401
  %v403 = vpop.f32.mrf.mxu0
  %404 = vmatprep.mubr.bf16.mxu0 0
  %405 = vmatmul.mubr.bf16.gmra.mxu0 %v227
  %v406 = vpop.f32.mrf.mxu0
  %v407 = vadd.f32 0.0, %v406
  %v408 = vpop.f32.mrf.mxu0
  %v409 = vpop.f32.mrf.mxu0
  %v410 = vadd.f32 0.0, %v409
  %v411 = vpop.f32.mrf.mxu0
  %412 = vmatprep.mubr.bf16.mxu0 0
  %413 = vmatmul.mubr.bf16.gmra.mxu0 %v230
  %v414 = vpop.f32.mrf.mxu0
  %v415 = vadd.f32 0.0, %v414
  %v416 = vpop.f32.mrf.mxu0
  %v417 = vpop.f32.mrf.mxu0
  %v418 = vadd.f32 0.0, %v417
  %v419 = vpop.f32.mrf.mxu0
  %420 = vmatprep.mubr.bf16.mxu0 0
  %421 = vmatmul.mubr.bf16.gmra.mxu0 %v233
  %v422 = vpop.f32.mrf.mxu0
  %v423 = vadd.f32 0.0, %v422
  %v424 = vpop.f32.mrf.mxu0
  %v425 = vpop.f32.mrf.mxu0
  %v426 = vadd.f32 0.0, %v425
  %v427 = vpop.f32.mrf.mxu0
  %428 = vmatprep.mubr.bf16.mxu0 0
  %429 = vmatmul.mubr.bf16.gmra.mxu0 %v236
  %v430 = vpop.f32.mrf.mxu0
  %v431 = vadd.f32 0.0, %v430
  %v432 = vpop.f32.mrf.mxu0
  %v433 = vpop.f32.mrf.mxu0
  %v434 = vadd.f32 0.0, %v433
  %v435 = vpop.f32.mrf.mxu0
  %436 = vmatprep.mubr.bf16.mxu0 0
  %437 = vmatmul.mubr.bf16.gmra.mxu0 %v239
  %v438 = vpop.f32.mrf.mxu0
  %v439 = vadd.f32 0.0, %v438
  %v440 = vpop.f32.mrf.mxu0
  %v441 = vpop.f32.mrf.mxu0
  %v442 = vadd.f32 0.0, %v441
  %v443 = vpop.f32.mrf.mxu0
  %444 = vmatprep.mubr.bf16.mxu0 0
  %445 = vmatmul.mubr.bf16.gmra.mxu0 %v242
  %v446 = vpop.f32.mrf.mxu0
  %v447 = vadd.f32 0.0, %v446
  %v448 = vpop.f32.mrf.mxu0
  %v449 = vpop.f32.mrf.mxu0
  %v450 = vadd.f32 0.0, %v449
  %v451 = vpop.f32.mrf.mxu0
  %452 = vdwg.mxu0
  %453 = vst.msk [vmem:[%s2] sm:$0xff] %vm177, %v279
  %454 = vst.msk [vmem:[%s2 + $0x8] sm:$0xff] %vm177, %v282
  %455 = vst.msk [vmem:[%s2 + $0x10] sm:$0xff] %vm177, %v287
  %456 = vst.msk [vmem:[%s2 + $0x18] sm:$0xff] %vm177, %v290
  %457 = vst.msk [vmem:[%s2 + $0x20] sm:$0xff] %vm177, %v295
  %458 = vst.msk [vmem:[%s2 + $0x28] sm:$0xff] %vm177, %v298
  %459 = vst.msk [vmem:[%s2 + $0x30] sm:$0xff] %vm177, %v303
  %460 = vst.msk [vmem:[%s2 + $0x38] sm:$0xff] %vm177, %v306
  %461 = vst.msk [vmem:[%s2 + $0x40] sm:$0xff] %vm177, %v311
  %462 = vst.msk [vmem:[%s2 + $0x48] sm:$0xff] %vm177, %v314
  %463 = vst.msk [vmem:[%s2 + $0x50] sm:$0xff] %vm177, %v319
  %464 = vst.msk [vmem:[%s2 + $0x58] sm:$0xff] %vm177, %v322
  %465 = vst.msk [vmem:[%s2 + $0x60] sm:$0xff] %vm177, %v327
  %466 = vst.msk [vmem:[%s2 + $0x68] sm:$0xff] %vm177, %v330
  %467 = vst.msk [vmem:[%s2 + $0x70] sm:$0xff] %vm177, %v335
  %468 = vst.msk [vmem:[%s2 + $0x78] sm:$0xff] %vm177, %v338
  %469 = vst.msk [vmem:[%s2 + $0x80] sm:$0xff] %vm177, %v343
  %470 = vst.msk [vmem:[%s2 + $0x88] sm:$0xff] %vm177, %v346
  %471 = vst.msk [vmem:[%s2 + $0x90] sm:$0xff] %vm177, %v351
  %472 = vst.msk [vmem:[%s2 + $0x98] sm:$0xff] %vm177, %v354
  %473 = vst.msk [vmem:[%s2 + $0xa0] sm:$0xff] %vm177, %v359
  %474 = vst.msk [vmem:[%s2 + $0xa8] sm:$0xff] %vm177, %v362
  %475 = vst.msk [vmem:[%s2 + $0xb0] sm:$0xff] %vm177, %v367
  %476 = vst.msk [vmem:[%s2 + $0xb8] sm:$0xff] %vm177, %v370
  %477 = vst.msk [vmem:[%s2 + $0xc0] sm:$0xff] %vm177, %v375
  %478 = vst.msk [vmem:[%s2 + $0xc8] sm:$0xff] %vm177, %v378
  %479 = vst.msk [vmem:[%s2 + $0xd0] sm:$0xff] %vm177, %v383
  %480 = vst.msk [vmem:[%s2 + $0xd8] sm:$0xff] %vm177, %v386
  %481 = vst.msk [vmem:[%s2 + $0xe0] sm:$0xff] %vm177, %v391
  %482 = vst.msk [vmem:[%s2 + $0xe8] sm:$0xff] %vm177, %v394
  %483 = vst.msk [vmem:[%s2 + $0xf0] sm:$0xff] %vm177, %v399
  %484 = vst.msk [vmem:[%s2 + $0xf8] sm:$0xff] %vm177, %v402
  %485 = vst.msk [vmem:[%s2 + $0x100] sm:$0xff] %vm177, %v407
  %486 = vst.msk [vmem:[%s2 + $0x108] sm:$0xff] %vm177, %v410
  %487 = vst.msk [vmem:[%s2 + $0x110] sm:$0xff] %vm177, %v415
  %488 = vst.msk [vmem:[%s2 + $0x118] sm:$0xff] %vm177, %v418
  %489 = vst.msk [vmem:[%s2 + $0x120] sm:$0xff] %vm177, %v423
  %490 = vst.msk [vmem:[%s2 + $0x128] sm:$0xff] %vm177, %v426
  %491 = vst.msk [vmem:[%s2 + $0x130] sm:$0xff] %vm177, %v431
  %492 = vst.msk [vmem:[%s2 + $0x138] sm:$0xff] %vm177, %v434
  %493 = vst.msk [vmem:[%s2 + $0x140] sm:$0xff] %vm177, %v439
  %494 = vst.msk [vmem:[%s2 + $0x148] sm:$0xff] %vm177, %v442
  %495 = vst.msk [vmem:[%s2 + $0x150] sm:$0xff] %vm177, %v447
  %496 = vst.msk [vmem:[%s2 + $0x158] sm:$0xff] %vm177, %v450
  %p497 = scmp.eq.s32.totalorder 0, 0
  // Predicated region
  $region10: #{discriminator_forward.5} parent=0 // pred_check
    %p498 = pneg %p497
  $region11: #{discriminator_forward.5} parent=0 // pred_check_branch
    %500 = sbr.rel (%p498) target = $region13
  $region12: #{discriminator_forward.5} parent=0 // pred_region
    %vm501 = vcmask 122880
    %502 = vst.msk [vmem:[%s3] sm:$0x1] %vm501, 0.0
    %503 = vst.msk [vmem:[%s4] sm:$0x1] %vm501, 0.0
  $region13: #{discriminator_forward.5} parent=0 // pred_fallthru
    _
  %v504 = vld [vmem:[%s3] sm:$0x1]
  %v505 = vsel %vm177, %v279, 0.0
  %v506 = vsel %vm177, %v282, 0.0
  %v507 = vadd.f32 %v505, %v506
  %v508 = vsel %vm177, %v287, 0.0
  %v509 = vadd.f32 %v507, %v508
  %v510 = vsel %vm177, %v290, 0.0
  %v511 = vadd.f32 %v509, %v510
  %v512 = vsel %vm177, %v295, 0.0
  %v513 = vadd.f32 %v511, %v512
  %v514 = vsel %vm177, %v298, 0.0
  %v515 = vadd.f32 %v513, %v514
  %v516 = vsel %vm177, %v303, 0.0
  %v517 = vadd.f32 %v515, %v516
  %v518 = vsel %vm177, %v306, 0.0
  %v519 = vadd.f32 %v517, %v518
  %v520 = vsel %vm177, %v311, 0.0
  %v521 = vadd.f32 %v519, %v520
  %v522 = vsel %vm177, %v314, 0.0
  %v523 = vadd.f32 %v521, %v522
  %v524 = vsel %vm177, %v319, 0.0
  %v525 = vadd.f32 %v523, %v524
  %v526 = vsel %vm177, %v322, 0.0
  %v527 = vadd.f32 %v525, %v526
  %v528 = vsel %vm177, %v327, 0.0
  %v529 = vadd.f32 %v527, %v528
  %v530 = vsel %vm177, %v330, 0.0
  %v531 = vadd.f32 %v529, %v530
  %v532 = vsel %vm177, %v335, 0.0
  %v533 = vadd.f32 %v531, %v532
  %v534 = vsel %vm177, %v338, 0.0
  %v535 = vadd.f32 %v533, %v534
  %v536 = vsel %vm177, %v343, 0.0
  %v537 = vadd.f32 %v535, %v536
  %v538 = vsel %vm177, %v346, 0.0
  %v539 = vadd.f32 %v537, %v538
  %v540 = vsel %vm177, %v351, 0.0
  %v541 = vadd.f32 %v539, %v540
  %v542 = vsel %vm177, %v354, 0.0
  %v543 = vadd.f32 %v541, %v542
  %v544 = vsel %vm177, %v359, 0.0
  %v545 = vadd.f32 %v543, %v544
  %v546 = vsel %vm177, %v362, 0.0
  %v547 = vadd.f32 %v545, %v546
  %v548 = vsel %vm177, %v367, 0.0
  %v549 = vadd.f32 %v547, %v548
  %v550 = vsel %vm177, %v370, 0.0
  %v551 = vadd.f32 %v549, %v550
  %v552 = vsel %vm177, %v375, 0.0
  %v553 = vadd.f32 %v551, %v552
  %v554 = vsel %vm177, %v378, 0.0
  %v555 = vadd.f32 %v553, %v554
  %v556 = vsel %vm177, %v383, 0.0
  %v557 = vadd.f32 %v555, %v556
  %v558 = vsel %vm177, %v386, 0.0
  %v559 = vadd.f32 %v557, %v558
  %v560 = vsel %vm177, %v391, 0.0
  %v561 = vadd.f32 %v559, %v560
  %v562 = vsel %vm177, %v394, 0.0
  %v563 = vadd.f32 %v561, %v562
  %v564 = vsel %vm177, %v399, 0.0
  %v565 = vadd.f32 %v563, %v564
  %v566 = vsel %vm177, %v402, 0.0
  %v567 = vadd.f32 %v565, %v566
  %v568 = vsel %vm177, %v407, 0.0
  %v569 = vadd.f32 %v567, %v568
  %v570 = vsel %vm177, %v410, 0.0
  %v571 = vadd.f32 %v569, %v570
  %v572 = vsel %vm177, %v415, 0.0
  %v573 = vadd.f32 %v571, %v572
  %v574 = vsel %vm177, %v418, 0.0
  %v575 = vadd.f32 %v573, %v574
  %v576 = vsel %vm177, %v423, 0.0
  %v577 = vadd.f32 %v575, %v576
  %v578 = vsel %vm177, %v426, 0.0
  %v579 = vadd.f32 %v577, %v578
  %v580 = vsel %vm177, %v431, 0.0
  %v581 = vadd.f32 %v579, %v580
  %v582 = vsel %vm177, %v434, 0.0
  %v583 = vadd.f32 %v581, %v582
  %v584 = vsel %vm177, %v439, 0.0
  %v585 = vadd.f32 %v583, %v584
  %v586 = vsel %vm177, %v442, 0.0
  %v587 = vadd.f32 %v585, %v586
  %v588 = vsel %vm177, %v447, 0.0
  %v589 = vadd.f32 %v587, %v588
  %v590 = vsel %vm177, %v450, 0.0
  %v591 = vadd.f32 %v589, %v590
  %v592 = vrot.slane %v591, 4
  %v593 = vadd.f32 %v591, %v592
  %v594 = vrot.slane %v593, 2
  %v595 = vadd.f32 %v593, %v594
  %v596 = vrot.slane %v595, 1
  %v597 = vadd.f32 %v595, %v596
  %v598 = vadd.f32 %v504, %v597
  %vm599 = vcmask 122880
  %600 = vst.msk [vmem:[%s3] sm:$0x1] %vm599, %v598
  %v601 = vld [vmem:[%s4] sm:$0x1]
  %v602 = vmul.f32 %v279, %v279
  %v603 = vmul.f32 %v282, %v282
  %v604 = vmul.f32 %v287, %v287
  %v605 = vmul.f32 %v290, %v290
  %v606 = vmul.f32 %v295, %v295
  %v607 = vmul.f32 %v298, %v298
  %v608 = vmul.f32 %v303, %v303
  %v609 = vmul.f32 %v306, %v306
  %v610 = vmul.f32 %v311, %v311
  %v611 = vmul.f32 %v314, %v314
  %v612 = vmul.f32 %v319, %v319
  %v613 = vmul.f32 %v322, %v322
  %v614 = vmul.f32 %v327, %v327
  %v615 = vmul.f32 %v330, %v330
  %v616 = vmul.f32 %v335, %v335
  %v617 = vmul.f32 %v338, %v338
  %v618 = vmul.f32 %v343, %v343
  %v619 = vmul.f32 %v346, %v346
  %v620 = vmul.f32 %v351, %v351
  %v621 = vmul.f32 %v354, %v354
  %v622 = vmul.f32 %v359, %v359
  %v623 = vmul.f32 %v362, %v362
  %v624 = vmul.f32 %v367, %v367
  %v625 = vmul.f32 %v370, %v370
  %v626 = vmul.f32 %v375, %v375
  %v627 = vmul.f32 %v378, %v378
  %v628 = vmul.f32 %v383, %v383
  %v629 = vmul.f32 %v386, %v386
  %v630 = vmul.f32 %v391, %v391
  %v631 = vmul.f32 %v394, %v394
  %v632 = vmul.f32 %v399, %v399
  %v633 = vmul.f32 %v402, %v402
  %v634 = vmul.f32 %v407, %v407
  %v635 = vmul.f32 %v410, %v410
  %v636 = vmul.f32 %v415, %v415
  %v637 = vmul.f32 %v418, %v418
  %v638 = vmul.f32 %v423, %v423
  %v639 = vmul.f32 %v426, %v426
  %v640 = vmul.f32 %v431, %v431
  %v641 = vmul.f32 %v434, %v434
  %v642 = vmul.f32 %v439, %v439
  %v643 = vmul.f32 %v442, %v442
  %v644 = vmul.f32 %v447, %v447
  %v645 = vmul.f32 %v450, %v450
  %v646 = vsel %vm177, %v602, 0.0
  %v647 = vsel %vm177, %v603, 0.0
  %v648 = vadd.f32 %v646, %v647
  %v649 = vsel %vm177, %v604, 0.0
  %v650 = vadd.f32 %v648, %v649
  %v651 = vsel %vm177, %v605, 0.0
  %v652 = vadd.f32 %v650, %v651
  %v653 = vsel %vm177, %v606, 0.0
  %v654 = vadd.f32 %v652, %v653
  %v655 = vsel %vm177, %v607, 0.0
  %v656 = vadd.f32 %v654, %v655
  %v657 = vsel %vm177, %v608, 0.0
  %v658 = vadd.f32 %v656, %v657
  %v659 = vsel %vm177, %v609, 0.0
  %v660 = vadd.f32 %v658, %v659
  %v661 = vsel %vm177, %v610, 0.0
  %v662 = vadd.f32 %v660, %v661
  %v663 = vsel %vm177, %v611, 0.0
  %v664 = vadd.f32 %v662, %v663
  %v665 = vsel %vm177, %v612, 0.0
  %v666 = vadd.f32 %v664, %v665
  %v667 = vsel %vm177, %v613, 0.0
  %v668 = vadd.f32 %v666, %v667
  %v669 = vsel %vm177, %v614, 0.0
  %v670 = vadd.f32 %v668, %v669
  %v671 = vsel %vm177, %v615, 0.0
  %v672 = vadd.f32 %v670, %v671
  %v673 = vsel %vm177, %v616, 0.0
  %v674 = vadd.f32 %v672, %v673
  %v675 = vsel %vm177, %v617, 0.0
  %v676 = vadd.f32 %v674, %v675
  %v677 = vsel %vm177, %v618, 0.0
  %v678 = vadd.f32 %v676, %v677
  %v679 = vsel %vm177, %v619, 0.0
  %v680 = vadd.f32 %v678, %v679
  %v681 = vsel %vm177, %v620, 0.0
  %v682 = vadd.f32 %v680, %v681
  %v683 = vsel %vm177, %v621, 0.0
  %v684 = vadd.f32 %v682, %v683
  %v685 = vsel %vm177, %v622, 0.0
  %v686 = vadd.f32 %v684, %v685
  %v687 = vsel %vm177, %v623, 0.0
  %v688 = vadd.f32 %v686, %v687
  %v689 = vsel %vm177, %v624, 0.0
  %v690 = vadd.f32 %v688, %v689
  %v691 = vsel %vm177, %v625, 0.0
  %v692 = vadd.f32 %v690, %v691
  %v693 = vsel %vm177, %v626, 0.0
  %v694 = vadd.f32 %v692, %v693
  %v695 = vsel %vm177, %v627, 0.0
  %v696 = vadd.f32 %v694, %v695
  %v697 = vsel %vm177, %v628, 0.0
  %v698 = vadd.f32 %v696, %v697
  %v699 = vsel %vm177, %v629, 0.0
  %v700 = vadd.f32 %v698, %v699
  %v701 = vsel %vm177, %v630, 0.0
  %v702 = vadd.f32 %v700, %v701
  %v703 = vsel %vm177, %v631, 0.0
  %v704 = vadd.f32 %v702, %v703
  %v705 = vsel %vm177, %v632, 0.0
  %v706 = vadd.f32 %v704, %v705
  %v707 = vsel %vm177, %v633, 0.0
  %v708 = vadd.f32 %v706, %v707
  %v709 = vsel %vm177, %v634, 0.0
  %v710 = vadd.f32 %v708, %v709
  %v711 = vsel %vm177, %v635, 0.0
  %v712 = vadd.f32 %v710, %v711
  %v713 = vsel %vm177, %v636, 0.0
  %v714 = vadd.f32 %v712, %v713
  %v715 = vsel %vm177, %v637, 0.0
  %v716 = vadd.f32 %v714, %v715
  %v717 = vsel %vm177, %v638, 0.0
  %v718 = vadd.f32 %v716, %v717
  %v719 = vsel %vm177, %v639, 0.0
  %v720 = vadd.f32 %v718, %v719
  %v721 = vsel %vm177, %v640, 0.0
  %v722 = vadd.f32 %v720, %v721
  %v723 = vsel %vm177, %v641, 0.0
  %v724 = vadd.f32 %v722, %v723
  %v725 = vsel %vm177, %v642, 0.0
  %v726 = vadd.f32 %v724, %v725
  %v727 = vsel %vm177, %v643, 0.0
  %v728 = vadd.f32 %v726, %v727
  %v729 = vsel %vm177, %v644, 0.0
  %v730 = vadd.f32 %v728, %v729
  %v731 = vsel %vm177, %v645, 0.0
  %v732 = vadd.f32 %v730, %v731
  %v733 = vrot.slane %v732, 4
  %v734 = vadd.f32 %v732, %v733
  %v735 = vrot.slane %v734, 2
  %v736 = vadd.f32 %v734, %v735
  %v737 = vrot.slane %v736, 1
  %v738 = vadd.f32 %v736, %v737
  %v739 = vadd.f32 %v601, %v738
  %740 = vst.msk [vmem:[%s4] sm:$0x1] %vm599, %v739
  // Predicated region
  $region14: #{discriminator_forward.5} parent=0 // pred_check
    _
  $region15: #{discriminator_forward.5} parent=0 // pred_check_branch
    %742 = sbr.rel (0) target = $region17
  $region16: #{discriminator_forward.5} parent=0 // pred_region
    _
  $region17: #{discriminator_forward.5} parent=0 // pred_fallthru
    _
  // Predicated region
  $region18: #{discriminator_forward.5} parent=0 // pred_check
    _
  $region19: #{discriminator_forward.5} parent=0 // pred_check_branch
    %744 = sbr.rel (0) target = $region21
  $region20: #{discriminator_forward.5} parent=0 // pred_region
    _
  $region21: #{discriminator_forward.5} parent=0 // pred_fallthru
    _
  // Predicated region
  $region22: #{discriminator_forward.5} parent=0 // pred_check
    _
  $region23: #{discriminator_forward.5} parent=0 // pred_check_branch
    %746 = sbr.rel (0) target = $region25
  $region24: #{discriminator_forward.5} parent=0 // pred_region
    _
  $region25: #{discriminator_forward.5} parent=0 // pred_fallthru
    _
  // Predicated region
  $region26: #{discriminator_forward.5} parent=0 // pred_check
    _
  $region27: #{discriminator_forward.5} parent=0 // pred_check_branch
    %748 = sbr.rel (0) target = $region29
  $region28: #{discriminator_forward.5} parent=0 // pred_region
    _
  $region29: #{discriminator_forward.5} parent=0 // pred_fallthru
    _
  // Predicated region
  $region30: #{discriminator_forward.5} parent=0 // pred_check
    _
  $region31: #{discriminator_forward.5} parent=0 // pred_check_branch
    %750 = sbr.rel (0) target = $region33
  $region32: #{discriminator_forward.5} parent=0 // pred_region
    _
  $region33: #{discriminator_forward.5} parent=0 // pred_fallthru
    _
  // Predicated region
  $region34: #{discriminator_forward.5} parent=0 // pred_check
    _
  $region35: #{discriminator_forward.5} parent=0 // pred_check_branch
    %752 = sbr.rel (0) target = $region37
  $region36: #{discriminator_forward.5} parent=0 // pred_region
    _
  $region37: #{discriminator_forward.5} parent=0 // pred_fallthru
    _

// kernel: discriminator_forward.8
$region0: #{discriminator_forward.8}
  #allocation0 [shape = 'u32[]', space=smem, size = 0x4, offset = 0x4, fixed_abs, tag = 'smem constant byte address 0x4 - core index']
  #allocation1 [shape = 'u32[144,128]{1,0:T(1,128)}', space=vmem, size = 0x12000, scoped, tag = 'internal scratch']
  %s0 = inlined_call_operand.vmem [shape: f32[64,32], index: 0, kind: input, shape index: {}]
  %s1 = inlined_call_operand.vmem [shape: f32[1,32], index: 1, kind: input, shape index: {}]
  %s2 = inlined_call_operand.vmem [shape: f32[1,32], index: 2, kind: input, shape index: {}]
  %s3 = inlined_call_operand.vmem [shape: bf16[64,32], index: 3, kind: output, shape index: {}]
  %s4 = sld [smem:[#allocation0]]
  $region22: #{discriminator_forward.8} parent=0
    _
  %s6 = ssub.s32 1, %s4
  %s7 = scalar_select 0, %s6, %s4
  // Predicated region
  $region2: #{discriminator_forward.8} parent=0 // pred_check
    _
  $region3: #{discriminator_forward.8} parent=0 // pred_check_branch
    %9 = sbr.rel (0) target = $region5
  $region4: #{discriminator_forward.8} parent=0 // pred_region
    _
  $region5: #{discriminator_forward.8} parent=0 // pred_fallthru
    _
  // Predicated region
  $region6: #{discriminator_forward.8} parent=0 // pred_check
    _
  $region7: #{discriminator_forward.8} parent=0 // pred_check_branch
    %11 = sbr.rel (0) target = $region9
  $region8: #{discriminator_forward.8} parent=0 // pred_region
    _
  $region9: #{discriminator_forward.8} parent=0 // pred_fallthru
    _
  // Predicated region
  $region10: #{discriminator_forward.8} parent=0 // pred_check
    _
  $region11: #{discriminator_forward.8} parent=0 // pred_check_branch
    %13 = sbr.rel (0) target = $region13
  $region12: #{discriminator_forward.8} parent=0 // pred_region
    _
  $region13: #{discriminator_forward.8} parent=0 // pred_fallthru
    _
  %v14 = vld [vmem:[%s0] sm:$0xff]
  %v15 = vld [vmem:[%s0 + $0x8] sm:$0xff]
  %v16 = vld [vmem:[%s0 + $0x10] sm:$0xff]
  %v17 = vld [vmem:[%s0 + $0x18] sm:$0xff]
  %v18 = vld [vmem:[%s0 + $0x20] sm:$0xff]
  %v19 = vld [vmem:[%s0 + $0x28] sm:$0xff]
  %v20 = vld [vmem:[%s0 + $0x30] sm:$0xff]
  %v21 = vld [vmem:[%s0 + $0x38] sm:$0xff]
  %v22 = vld [vmem:[%s1] sm:$0x1]
  %v24 = vlaneseq
  %v25 = vshrl.u32 %v24, 7
  %v26 = vsub.s32 0, %v25
  %v27 = vrot.slane %v22, %v26
  %v29 = vmul.f32 %v14, %v27
  %v30 = vmul.f32 %v15, %v27
  %v31 = vmul.f32 %v16, %v27
  %v32 = vmul.f32 %v17, %v27
  %v33 = vmul.f32 %v18, %v27
  %v34 = vmul.f32 %v19, %v27
  %v35 = vmul.f32 %v20, %v27
  %v36 = vmul.f32 %v21, %v27
  %v37 = vld [vmem:[%s2] sm:$0x1]
  %v39 = vlaneseq
  %v40 = vshrl.u32 %v39, 7
  %v41 = vsub.s32 0, %v40
  %v42 = vrot.slane %v37, %v41
  %v44 = vadd.f32 %v29, %v42
  %v45 = vadd.f32 %v30, %v42
  %v46 = vadd.f32 %v31, %v42
  %v47 = vadd.f32 %v32, %v42
  %v48 = vadd.f32 %v33, %v42
  %v49 = vadd.f32 %v34, %v42
  %v50 = vadd.f32 %v35, %v42
  %v51 = vadd.f32 %v36, %v42
  %vm52 = vcmp.ge.f32.partialorder %v44, 0.0
  %vm53 = vcmp.ge.f32.partialorder %v45, 0.0
  %vm54 = vcmp.ge.f32.partialorder %v46, 0.0
  %vm55 = vcmp.ge.f32.partialorder %v47, 0.0
  %vm56 = vcmp.ge.f32.partialorder %v48, 0.0
  %vm57 = vcmp.ge.f32.partialorder %v49, 0.0
  %vm58 = vcmp.ge.f32.partialorder %v50, 0.0
  %vm59 = vcmp.ge.f32.partialorder %v51, 0.0
  %v60 = vmul.f32 %v44, 0.2
  %v61 = vmul.f32 %v45, 0.2
  %v62 = vmul.f32 %v46, 0.2
  %v63 = vmul.f32 %v47, 0.2
  %v64 = vmul.f32 %v48, 0.2
  %v65 = vmul.f32 %v49, 0.2
  %v66 = vmul.f32 %v50, 0.2
  %v67 = vmul.f32 %v51, 0.2
  %v68 = vsel %vm52, %v44, %v60
  %v69 = vsel %vm53, %v45, %v61
  %v70 = vsel %vm54, %v46, %v62
  %v71 = vsel %vm55, %v47, %v63
  %v72 = vsel %vm56, %v48, %v64
  %v73 = vsel %vm57, %v49, %v65
  %v74 = vsel %vm58, %v50, %v66
  %v75 = vsel %vm59, %v51, %v67
  %v76 = vpack.c.bf16 %v69, %v68
  %v77 = vpack.c.bf16 %v71, %v70
  %v78 = vpack.c.bf16 %v73, %v72
  %v79 = vpack.c.bf16 %v75, %v74
  %v84 = vunpack.c.l.b16 %v76
  %v85 = vunpack.c.h.b16 %v76
  %v86 = vunpack.c.l.b16 %v77
  %v87 = vunpack.c.h.b16 %v77
  %v88 = vunpack.c.l.b16 %v78
  %v89 = vunpack.c.h.b16 %v78
  %v90 = vunpack.c.l.b16 %v79
  %v91 = vunpack.c.h.b16 %v79
  %v92 = vpack.c.b16 %v84, %v84
  %v93 = vpack.c.b16 %v85, %v85
  %v94 = vpack.c.b16 %v86, %v86
  %v95 = vpack.c.b16 %v87, %v87
  %v96 = vpack.c.b16 %v88, %v88
  %v97 = vpack.c.b16 %v89, %v89
  %v98 = vpack.c.b16 %v90, %v90
  %v99 = vpack.c.b16 %v91, %v91
  %vm108 = vcmask 257024
  %109 = vst.msk [vmem:[%s3] sm:$0xf] %vm108, %v92
  %110 = vst.msk [vmem:[%s3 + $0x4] sm:$0xf] %vm108, %v93
  %111 = vst.msk [vmem:[%s3 + $0x8] sm:$0xf] %vm108, %v94
  %112 = vst.msk [vmem:[%s3 + $0xc] sm:$0xf] %vm108, %v95
  %113 = vst.msk [vmem:[%s3 + $0x10] sm:$0xf] %vm108, %v96
  %114 = vst.msk [vmem:[%s3 + $0x14] sm:$0xf] %vm108, %v97
  %115 = vst.msk [vmem:[%s3 + $0x18] sm:$0xf] %vm108, %v98
  %116 = vst.msk [vmem:[%s3 + $0x1c] sm:$0xf] %vm108, %v99
  // Predicated region
  $region14: #{discriminator_forward.8} parent=0 // pred_check
    _
  $region15: #{discriminator_forward.8} parent=0 // pred_check_branch
    %118 = sbr.rel (0) target = $region17
  $region16: #{discriminator_forward.8} parent=0 // pred_region
    _
  $region17: #{discriminator_forward.8} parent=0 // pred_fallthru
    _
  // Predicated region
  $region18: #{discriminator_forward.8} parent=0 // pred_check
    _
  $region19: #{discriminator_forward.8} parent=0 // pred_check_branch
    %120 = sbr.rel (0) target = $region21
  $region20: #{discriminator_forward.8} parent=0 // pred_region
    _
  $region21: #{discriminator_forward.8} parent=0 // pred_fallthru
    _

// kernel: discriminator_forward.7
$region0: #{discriminator_forward.7}
  #allocation0 [shape = 'u32[]', space=smem, size = 0x4, offset = 0x4, fixed_abs, tag = 'smem constant byte address 0x4 - core index']
  #allocation1 [shape = 'u32[144,128]{1,0:T(1,128)}', space=vmem, size = 0x12000, scoped, tag = 'internal scratch']
  %s0 = inlined_call_operand.vmem [shape: bf16[64,256], index: 0, kind: input, shape index: {}]
  %s1 = inlined_call_operand.vmem [shape: bf16[256,32], index: 1, kind: input, shape index: {}]
  %s2 = inlined_call_operand.vmem [shape: f32[64,32], index: 2, kind: output, shape index: {0}]
  %s3 = inlined_call_operand.vmem [shape: f32[1,32], index: 3, kind: output, shape index: {1}]
  %s4 = inlined_call_operand.vmem [shape: f32[1,32], index: 4, kind: output, shape index: {2}]
  %5 = xla_tuple %s2, %s3, %s4
  %s6 = sld [smem:[#allocation0]]
  $region38: #{discriminator_forward.7} parent=0
    _
  %s8 = ssub.s32 1, %s6
  %s9 = scalar_select 0, %s8, %s6
  // Predicated region
  $region2: #{discriminator_forward.7} parent=0 // pred_check
    _
  $region3: #{discriminator_forward.7} parent=0 // pred_check_branch
    %11 = sbr.rel (0) target = $region5
  $region4: #{discriminator_forward.7} parent=0 // pred_region
    _
  $region5: #{discriminator_forward.7} parent=0 // pred_fallthru
    _
  // Predicated region
  $region6: #{discriminator_forward.7} parent=0 // pred_check
    _
  $region7: #{discriminator_forward.7} parent=0 // pred_check_branch
    %13 = sbr.rel (0) target = $region9
  $region8: #{discriminator_forward.7} parent=0 // pred_region
    _
  $region9: #{discriminator_forward.7} parent=0 // pred_fallthru
    _
  %v15 = vld [vmem:[%s0] sm:$0xff]
  %v16 = vld [vmem:[%s0 + $0x8] sm:$0xff]
  %v17 = vld [vmem:[%s0 + $0x10] sm:$0xff]
  %v18 = vld [vmem:[%s0 + $0x18] sm:$0xff]
  %v19 = vld [vmem:[%s0 + $0x20] sm:$0xff]
  %v20 = vld [vmem:[%s0 + $0x28] sm:$0xff]
  %v21 = vld [vmem:[%s0 + $0x30] sm:$0xff]
  %v22 = vld [vmem:[%s0 + $0x38] sm:$0xff]
  %v23 = vld [vmem:[%s1] sm:$0xf]
  %v24 = vld [vmem:[%s1 + $0x4] sm:$0xf]
  %v25 = vld [vmem:[%s1 + $0x8] sm:$0xf]
  %v26 = vld [vmem:[%s1 + $0xc] sm:$0xf]
  %v27 = vld [vmem:[%s1 + $0x10] sm:$0xf]
  %v28 = vld [vmem:[%s1 + $0x14] sm:$0xf]
  %v29 = vld [vmem:[%s1 + $0x18] sm:$0xf]
  %v30 = vld [vmem:[%s1 + $0x1c] sm:$0xf]
  %v31 = vld [vmem:[%s1 + $0x20] sm:$0xf]
  %v32 = vld [vmem:[%s1 + $0x24] sm:$0xf]
  %v33 = vld [vmem:[%s1 + $0x28] sm:$0xf]
  %v34 = vld [vmem:[%s1 + $0x2c] sm:$0xf]
  %v35 = vld [vmem:[%s1 + $0x30] sm:$0xf]
  %v36 = vld [vmem:[%s1 + $0x34] sm:$0xf]
  %v37 = vld [vmem:[%s1 + $0x38] sm:$0xf]
  %v38 = vld [vmem:[%s1 + $0x3c] sm:$0xf]
  %v39 = vld [vmem:[%s1 + $0x40] sm:$0xf]
  %v40 = vld [vmem:[%s1 + $0x44] sm:$0xf]
  %v41 = vld [vmem:[%s1 + $0x48] sm:$0xf]
  %v42 = vld [vmem:[%s1 + $0x4c] sm:$0xf]
  %v43 = vld [vmem:[%s1 + $0x50] sm:$0xf]
  %v44 = vld [vmem:[%s1 + $0x54] sm:$0xf]
  %v45 = vld [vmem:[%s1 + $0x58] sm:$0xf]
  %v46 = vld [vmem:[%s1 + $0x5c] sm:$0xf]
  %v47 = vld [vmem:[%s1 + $0x60] sm:$0xf]
  %v48 = vld [vmem:[%s1 + $0x64] sm:$0xf]
  %v49 = vld [vmem:[%s1 + $0x68] sm:$0xf]
  %v50 = vld [vmem:[%s1 + $0x6c] sm:$0xf]
  %v51 = vld [vmem:[%s1 + $0x70] sm:$0xf]
  %v52 = vld [vmem:[%s1 + $0x74] sm:$0xf]
  %v53 = vld [vmem:[%s1 + $0x78] sm:$0xf]
  %v54 = vld [vmem:[%s1 + $0x7c] sm:$0xf]
  %v63 = vunpack.c.l.b16 %v15
  %v64 = vunpack.c.h.b16 %v15
  %v65 = vunpack.c.l.b16 %v16
  %v66 = vunpack.c.h.b16 %v16
  %v67 = vunpack.c.l.b16 %v17
  %v68 = vunpack.c.h.b16 %v17
  %v69 = vunpack.c.l.b16 %v18
  %v70 = vunpack.c.h.b16 %v18
  %v71 = vunpack.c.l.b16 %v19
  %v72 = vunpack.c.h.b16 %v19
  %v73 = vunpack.c.l.b16 %v20
  %v74 = vunpack.c.h.b16 %v20
  %v75 = vunpack.c.l.b16 %v21
  %v76 = vunpack.c.h.b16 %v21
  %v77 = vunpack.c.l.b16 %v22
  %v78 = vunpack.c.h.b16 %v22
  %v79 = vpack.c.b16 %v65, %v63
  %v80 = vpack.c.b16 %v66, %v64
  %v81 = vpack.c.b16 %v69, %v67
  %v82 = vpack.c.b16 %v70, %v68
  %v83 = vpack.c.b16 %v73, %v71
  %v84 = vpack.c.b16 %v74, %v72
  %v85 = vpack.c.b16 %v77, %v75
  %v86 = vpack.c.b16 %v78, %v76
  %v127 = vunpack.c.l.b16 %v23
  %v128 = vunpack.c.l.b16 %v24
  %v129 = vunpack.c.l.b16 %v25
  %v130 = vunpack.c.l.b16 %v26
  %v131 = vunpack.c.l.b16 %v27
  %v132 = vunpack.c.l.b16 %v28
  %v133 = vunpack.c.l.b16 %v29
  %v134 = vunpack.c.l.b16 %v30
  %v135 = vunpack.c.l.b16 %v31
  %v136 = vunpack.c.l.b16 %v32
  %v137 = vunpack.c.l.b16 %v33
  %v138 = vunpack.c.l.b16 %v34
  %v139 = vunpack.c.l.b16 %v35
  %v140 = vunpack.c.l.b16 %v36
  %v141 = vunpack.c.l.b16 %v37
  %v142 = vunpack.c.l.b16 %v38
  %v143 = vunpack.c.l.b16 %v39
  %v144 = vunpack.c.l.b16 %v40
  %v145 = vunpack.c.l.b16 %v41
  %v146 = vunpack.c.l.b16 %v42
  %v147 = vunpack.c.l.b16 %v43
  %v148 = vunpack.c.l.b16 %v44
  %v149 = vunpack.c.l.b16 %v45
  %v150 = vunpack.c.l.b16 %v46
  %v151 = vunpack.c.l.b16 %v47
  %v152 = vunpack.c.l.b16 %v48
  %v153 = vunpack.c.l.b16 %v49
  %v154 = vunpack.c.l.b16 %v50
  %v155 = vunpack.c.l.b16 %v51
  %v156 = vunpack.c.l.b16 %v52
  %v157 = vunpack.c.l.b16 %v53
  %v158 = vunpack.c.l.b16 %v54
  %v159 = vpack.c.b16 %v128, %v127
  %v160 = vpack.c.b16 %v130, %v129
  %v161 = vpack.c.b16 %v132, %v131
  %v162 = vpack.c.b16 %v134, %v133
  %v163 = vpack.c.b16 %v136, %v135
  %v164 = vpack.c.b16 %v138, %v137
  %v165 = vpack.c.b16 %v140, %v139
  %v166 = vpack.c.b16 %v142, %v141
  %v167 = vpack.c.b16 %v144, %v143
  %v168 = vpack.c.b16 %v146, %v145
  %v169 = vpack.c.b16 %v148, %v147
  %v170 = vpack.c.b16 %v150, %v149
  %v171 = vpack.c.b16 %v152, %v151
  %v172 = vpack.c.b16 %v154, %v153
  %v173 = vpack.c.b16 %v156, %v155
  %v174 = vpack.c.b16 %v158, %v157
  %191 = vmatprep.subr.bf16.mxu0 0
  %192 = vmatpush1.bf16.msra.mxu0 %v166
  %193 = vmatprep.subr.bf16.mxu0 0
  %194 = vmatpush1.bf16.msra.mxu0 %v165
  %195 = vmatprep.subr.bf16.mxu0 0
  %196 = vmatpush1.bf16.msra.mxu0 %v164
  %197 = vmatprep.subr.bf16.mxu0 0
  %198 = vmatpush1.bf16.msra.mxu0 %v163
  %199 = vmatprep.subr.bf16.mxu0 0
  %200 = vmatpush1.bf16.msra.mxu0 %v162
  %201 = vmatprep.subr.bf16.mxu0 0
  %202 = vmatpush1.bf16.msra.mxu0 %v161
  %203 = vmatprep.subr.bf16.mxu0 0
  %204 = vmatpush1.bf16.msra.mxu0 %v160
  %205 = vmatprep.subr.bf16.mxu0 0
  %206 = vmatpush1.bf16.msra.mxu0 %v159
  %207 = vmatprep.subr.bf16.mxu0 0
  %208 = vmatpush2.bf16.msra.mxu0 %v174
  %209 = vmatprep.subr.bf16.mxu0 0
  %210 = vmatpush2.bf16.msra.mxu0 %v173
  %211 = vmatprep.subr.bf16.mxu0 0
  %212 = vmatpush2.bf16.msra.mxu0 %v172
  %213 = vmatprep.subr.bf16.mxu0 0
  %214 = vmatpush2.bf16.msra.mxu0 %v171
  %215 = vmatprep.subr.bf16.mxu0 0
  %216 = vmatpush2.bf16.msra.mxu0 %v170
  %217 = vmatprep.subr.bf16.mxu0 0
  %218 = vmatpush2.bf16.msra.mxu0 %v169
  %219 = vmatprep.subr.bf16.mxu0 0
  %220 = vmatpush2.bf16.msra.mxu0 %v168
  %221 = vmatprep.subr.bf16.mxu0 0
  %222 = vmatpush2.bf16.msra.mxu0 %v167
  %223 = vmatprep.mubr.bf16.mxu0 %v80
  %224 = vmatmul.mubr.bf16.gmra.mxu0 %v79
  %v225 = vpop.f32.mrf.mxu0
  %v226 = vadd.f32 0.0, %v225
  %v227 = vpop.f32.mrf.mxu0
  %v228 = vpop.f32.mrf.mxu0
  %v229 = vadd.f32 0.0, %v228
  %v230 = vpop.f32.mrf.mxu0
  %231 = vmatprep.mubr.bf16.mxu0 %v82
  %232 = vmatmul.mubr.bf16.gmra.mxu0 %v81
  %v233 = vpop.f32.mrf.mxu0
  %v234 = vadd.f32 0.0, %v233
  %v235 = vpop.f32.mrf.mxu0
  %v236 = vpop.f32.mrf.mxu0
  %v237 = vadd.f32 0.0, %v236
  %v238 = vpop.f32.mrf.mxu0
  %239 = vmatprep.mubr.bf16.mxu0 %v84
  %240 = vmatmul.mubr.bf16.gmra.mxu0 %v83
  %v241 = vpop.f32.mrf.mxu0
  %v242 = vadd.f32 0.0, %v241
  %v243 = vpop.f32.mrf.mxu0
  %v244 = vpop.f32.mrf.mxu0
  %v245 = vadd.f32 0.0, %v244
  %v246 = vpop.f32.mrf.mxu0
  %247 = vmatprep.mubr.bf16.mxu0 %v86
  %248 = vmatmul.mubr.bf16.gmra.mxu0 %v85
  %v249 = vpop.f32.mrf.mxu0
  %v250 = vadd.f32 0.0, %v249
  %v251 = vpop.f32.mrf.mxu0
  %v252 = vpop.f32.mrf.mxu0
  %v253 = vadd.f32 0.0, %v252
  %v254 = vpop.f32.mrf.mxu0
  %255 = vdwg.mxu0
  %vm256 = vcmask 261120
  %257 = vst.msk [vmem:[%s2] sm:$0xff] %vm256, %v226
  %258 = vst.msk [vmem:[%s2 + $0x8] sm:$0xff] %vm256, %v229
  %259 = vst.msk [vmem:[%s2 + $0x10] sm:$0xff] %vm256, %v234
  %260 = vst.msk [vmem:[%s2 + $0x18] sm:$0xff] %vm256, %v237
  %261 = vst.msk [vmem:[%s2 + $0x20] sm:$0xff] %vm256, %v242
  %262 = vst.msk [vmem:[%s2 + $0x28] sm:$0xff] %vm256, %v245
  %263 = vst.msk [vmem:[%s2 + $0x30] sm:$0xff] %vm256, %v250
  %264 = vst.msk [vmem:[%s2 + $0x38] sm:$0xff] %vm256, %v253
  %p265 = scmp.eq.s32.totalorder 0, 0
  // Predicated region
  $region10: #{discriminator_forward.7} parent=0 // pred_check
    %p266 = pneg %p265
  $region11: #{discriminator_forward.7} parent=0 // pred_check_branch
    %268 = sbr.rel (%p266) target = $region13
  $region12: #{discriminator_forward.7} parent=0 // pred_region
    %vm269 = vcmask 253952
    %270 = vst.msk [vmem:[%s3] sm:$0x1] %vm269, 0.0
    %271 = vst.msk [vmem:[%s4] sm:$0x1] %vm269, 0.0
  $region13: #{discriminator_forward.7} parent=0 // pred_fallthru
    _
  %v272 = vld [vmem:[%s3] sm:$0x1]
  %v273 = vsel %vm256, %v226, 0.0
  %v274 = vsel %vm256, %v229, 0.0
  %v275 = vadd.f32 %v273, %v274
  %v276 = vsel %vm256, %v234, 0.0
  %v277 = vadd.f32 %v275, %v276
  %v278 = vsel %vm256, %v237, 0.0
  %v279 = vadd.f32 %v277, %v278
  %v280 = vsel %vm256, %v242, 0.0
  %v281 = vadd.f32 %v279, %v280
  %v282 = vsel %vm256, %v245, 0.0
  %v283 = vadd.f32 %v281, %v282
  %v284 = vsel %vm256, %v250, 0.0
  %v285 = vadd.f32 %v283, %v284
  %v286 = vsel %vm256, %v253, 0.0
  %v287 = vadd.f32 %v285, %v286
  %v288 = vrot.slane %v287, 4
  %v289 = vadd.f32 %v287, %v288
  %v290 = vrot.slane %v289, 2
  %v291 = vadd.f32 %v289, %v290
  %v292 = vrot.slane %v291, 1
  %v293 = vadd.f32 %v291, %v292
  %v294 = vadd.f32 %v272, %v293
  %vm295 = vcmask 253952
  %296 = vst.msk [vmem:[%s3] sm:$0x1] %vm295, %v294
  %v297 = vld [vmem:[%s4] sm:$0x1]
  %v298 = vmul.f32 %v226, %v226
  %v299 = vmul.f32 %v229, %v229
  %v300 = vmul.f32 %v234, %v234
  %v301 = vmul.f32 %v237, %v237
  %v302 = vmul.f32 %v242, %v242
  %v303 = vmul.f32 %v245, %v245
  %v304 = vmul.f32 %v250, %v250
  %v305 = vmul.f32 %v253, %v253
  %v306 = vsel %vm256, %v298, 0.0
  %v307 = vsel %vm256, %v299, 0.0
  %v308 = vadd.f32 %v306, %v307
  %v309 = vsel %vm256, %v300, 0.0
  %v310 = vadd.f32 %v308, %v309
  %v311 = vsel %vm256, %v301, 0.0
  %v312 = vadd.f32 %v310, %v311
  %v313 = vsel %vm256, %v302, 0.0
  %v314 = vadd.f32 %v312, %v313
  %v315 = vsel %vm256, %v303, 0.0
  %v316 = vadd.f32 %v314, %v315
  %v317 = vsel %vm256, %v304, 0.0
  %v318 = vadd.f32 %v316, %v317
  %v319 = vsel %vm256, %v305, 0.0
  %v320 = vadd.f32 %v318, %v319
  %v321 = vrot.slane %v320, 4
  %v322 = vadd.f32 %v320, %v321
  %v323 = vrot.slane %v322, 2
  %v324 = vadd.f32 %v322, %v323
  %v325 = vrot.slane %v324, 1
  %v326 = vadd.f32 %v324, %v325
  %v327 = vadd.f32 %v297, %v326
  %328 = vst.msk [vmem:[%s4] sm:$0x1] %vm295, %v327
  // Predicated region
  $region14: #{discriminator_forward.7} parent=0 // pred_check
    _
  $region15: #{discriminator_forward.7} parent=0 // pred_check_branch
    %330 = sbr.rel (0) target = $region17
  $region16: #{discriminator_forward.7} parent=0 // pred_region
    _
  $region17: #{discriminator_forward.7} parent=0 // pred_fallthru
    _
  // Predicated region
  $region18: #{discriminator_forward.7} parent=0 // pred_check
    _
  $region19: #{discriminator_forward.7} parent=0 // pred_check_branch
    %332 = sbr.rel (0) target = $region21
  $region20: #{discriminator_forward.7} parent=0 // pred_region
    _
  $region21: #{discriminator_forward.7} parent=0 // pred_fallthru
    _
  // Predicated region
  $region22: #{discriminator_forward.7} parent=0 // pred_check
    _
  $region23: #{discriminator_forward.7} parent=0 // pred_check_branch
    %334 = sbr.rel (0) target = $region25
  $region24: #{discriminator_forward.7} parent=0 // pred_region
    _
  $region25: #{discriminator_forward.7} parent=0 // pred_fallthru
    _
  // Predicated region
  $region26: #{discriminator_forward.7} parent=0 // pred_check
    _
  $region27: #{discriminator_forward.7} parent=0 // pred_check_branch
    %336 = sbr.rel (0) target = $region29
  $region28: #{discriminator_forward.7} parent=0 // pred_region
    _
  $region29: #{discriminator_forward.7} parent=0 // pred_fallthru
    _
  // Predicated region
  $region30: #{discriminator_forward.7} parent=0 // pred_check
    _
  $region31: #{discriminator_forward.7} parent=0 // pred_check_branch
    %338 = sbr.rel (0) target = $region33
  $region32: #{discriminator_forward.7} parent=0 // pred_region
    _
  $region33: #{discriminator_forward.7} parent=0 // pred_fallthru
    _
  // Predicated region
  $region34: #{discriminator_forward.7} parent=0 // pred_check
    _
  $region35: #{discriminator_forward.7} parent=0 // pred_check_branch
    %340 = sbr.rel (0) target = $region37
  $region36: #{discriminator_forward.7} parent=0 // pred_region
    _
  $region37: #{discriminator_forward.7} parent=0 // pred_fallthru
    _

// kernel: discriminator_forward.9
$region0: #{discriminator_forward.9}
  #allocation0 [shape = 'u32[]', space=smem, size = 0x4, offset = 0x4, fixed_abs, tag = 'smem constant byte address 0x4 - core index']
  #allocation1 [shape = 'u32[144,128]{1,0:T(1,128)}', space=vmem, size = 0x12000, scoped, tag = 'internal scratch']
  #allocation2 [shape = 'f32[1,1]{1,0:T(1,128)S(1)}', space=vmem, size = 0x200, scoped, tag = 'scoped memory for discriminator_forward.9']
  %s0 = inlined_call_operand.vmem [shape: bf16[16,512], index: 0, kind: input, shape index: {}]
  %s1 = inlined_call_operand.vmem [shape: bf16[512,1], index: 1, kind: input, shape index: {}]
  %s2 = inlined_call_operand.<no memory space> [shape: f32[1,1], index: 2, kind: input, shape index: {}]
  %s3 = inlined_call_operand.vmem [shape: f32[16,1], index: 3, kind: output, shape index: {}]
  %s4 = sld [smem:[#allocation0]]
  $region22: #{discriminator_forward.9} parent=0
    _
  %s6 = ssub.s32 1, %s4
  %s7 = scalar_select 0, %s6, %s4
  %v8 = vstv %s2
  %9 = vst [vmem:[#allocation2] sm:$0x1] %v8
  // Predicated region
  $region2: #{discriminator_forward.9} parent=0 // pred_check
    _
  $region3: #{discriminator_forward.9} parent=0 // pred_check_branch
    %11 = sbr.rel (0) target = $region5
  $region4: #{discriminator_forward.9} parent=0 // pred_region
    _
  $region5: #{discriminator_forward.9} parent=0 // pred_fallthru
    _
  // Predicated region
  $region6: #{discriminator_forward.9} parent=0 // pred_check
    _
  $region7: #{discriminator_forward.9} parent=0 // pred_check_branch
    %13 = sbr.rel (0) target = $region9
  $region8: #{discriminator_forward.9} parent=0 // pred_region
    _
  $region9: #{discriminator_forward.9} parent=0 // pred_fallthru
    _
  // Predicated region
  $region10: #{discriminator_forward.9} parent=0 // pred_check
    _
  $region11: #{discriminator_forward.9} parent=0 // pred_check_branch
    %15 = sbr.rel (0) target = $region13
  $region12: #{discriminator_forward.9} parent=0 // pred_region
    _
  $region13: #{discriminator_forward.9} parent=0 // pred_fallthru
    _
  %v17 = vld [vmem:[%s0] sm:$0xff]
  %v18 = vld [vmem:[%s0 + $0x8] sm:$0xff]
  %v19 = vld [vmem:[%s0 + $0x10] sm:$0xff]
  %v20 = vld [vmem:[%s0 + $0x18] sm:$0xff]
  %v21 = vld [vmem:[%s1] sm:$0xf]
  %v22 = vld [vmem:[%s1 + $0x4] sm:$0xf]
  %v23 = vld [vmem:[%s1 + $0x8] sm:$0xf]
  %v24 = vld [vmem:[%s1 + $0xc] sm:$0xf]
  %v25 = vld [vmem:[%s1 + $0x10] sm:$0xf]
  %v26 = vld [vmem:[%s1 + $0x14] sm:$0xf]
  %v27 = vld [vmem:[%s1 + $0x18] sm:$0xf]
  %v28 = vld [vmem:[%s1 + $0x1c] sm:$0xf]
  %v29 = vld [vmem:[%s1 + $0x20] sm:$0xf]
  %v30 = vld [vmem:[%s1 + $0x24] sm:$0xf]
  %v31 = vld [vmem:[%s1 + $0x28] sm:$0xf]
  %v32 = vld [vmem:[%s1 + $0x2c] sm:$0xf]
  %v33 = vld [vmem:[%s1 + $0x30] sm:$0xf]
  %v34 = vld [vmem:[%s1 + $0x34] sm:$0xf]
  %v35 = vld [vmem:[%s1 + $0x38] sm:$0xf]
  %v36 = vld [vmem:[%s1 + $0x3c] sm:$0xf]
  %v37 = vld [vmem:[%s1 + $0x40] sm:$0xf]
  %v38 = vld [vmem:[%s1 + $0x44] sm:$0xf]
  %v39 = vld [vmem:[%s1 + $0x48] sm:$0xf]
  %v40 = vld [vmem:[%s1 + $0x4c] sm:$0xf]
  %v41 = vld [vmem:[%s1 + $0x50] sm:$0xf]
  %v42 = vld [vmem:[%s1 + $0x54] sm:$0xf]
  %v43 = vld [vmem:[%s1 + $0x58] sm:$0xf]
  %v44 = vld [vmem:[%s1 + $0x5c] sm:$0xf]
  %v45 = vld [vmem:[%s1 + $0x60] sm:$0xf]
  %v46 = vld [vmem:[%s1 + $0x64] sm:$0xf]
  %v47 = vld [vmem:[%s1 + $0x68] sm:$0xf]
  %v48 = vld [vmem:[%s1 + $0x6c] sm:$0xf]
  %v49 = vld [vmem:[%s1 + $0x70] sm:$0xf]
  %v50 = vld [vmem:[%s1 + $0x74] sm:$0xf]
  %v51 = vld [vmem:[%s1 + $0x78] sm:$0xf]
  %v52 = vld [vmem:[%s1 + $0x7c] sm:$0xf]
  %v53 = vld [vmem:[%s1 + $0x80] sm:$0xf]
  %v54 = vld [vmem:[%s1 + $0x84] sm:$0xf]
  %v55 = vld [vmem:[%s1 + $0x88] sm:$0xf]
  %v56 = vld [vmem:[%s1 + $0x8c] sm:$0xf]
  %v57 = vld [vmem:[%s1 + $0x90] sm:$0xf]
  %v58 = vld [vmem:[%s1 + $0x94] sm:$0xf]
  %v59 = vld [vmem:[%s1 + $0x98] sm:$0xf]
  %v60 = vld [vmem:[%s1 + $0x9c] sm:$0xf]
  %v61 = vld [vmem:[%s1 + $0xa0] sm:$0xf]
  %v62 = vld [vmem:[%s1 + $0xa4] sm:$0xf]
  %v63 = vld [vmem:[%s1 + $0xa8] sm:$0xf]
  %v64 = vld [vmem:[%s1 + $0xac] sm:$0xf]
  %v65 = vld [vmem:[%s1 + $0xb0] sm:$0xf]
  %v66 = vld [vmem:[%s1 + $0xb4] sm:$0xf]
  %v67 = vld [vmem:[%s1 + $0xb8] sm:$0xf]
  %v68 = vld [vmem:[%s1 + $0xbc] sm:$0xf]
  %v69 = vld [vmem:[%s1 + $0xc0] sm:$0xf]
  %v70 = vld [vmem:[%s1 + $0xc4] sm:$0xf]
  %v71 = vld [vmem:[%s1 + $0xc8] sm:$0xf]
  %v72 = vld [vmem:[%s1 + $0xcc] sm:$0xf]
  %v73 = vld [vmem:[%s1 + $0xd0] sm:$0xf]
  %v74 = vld [vmem:[%s1 + $0xd4] sm:$0xf]
  %v75 = vld [vmem:[%s1 + $0xd8] sm:$0xf]
  %v76 = vld [vmem:[%s1 + $0xdc] sm:$0xf]
  %v77 = vld [vmem:[%s1 + $0xe0] sm:$0xf]
  %v78 = vld [vmem:[%s1 + $0xe4] sm:$0xf]
  %v79 = vld [vmem:[%s1 + $0xe8] sm:$0xf]
  %v80 = vld [vmem:[%s1 + $0xec] sm:$0xf]
  %v81 = vld [vmem:[%s1 + $0xf0] sm:$0xf]
  %v82 = vld [vmem:[%s1 + $0xf4] sm:$0xf]
  %v83 = vld [vmem:[%s1 + $0xf8] sm:$0xf]
  %v84 = vld [vmem:[%s1 + $0xfc] sm:$0xf]
  %v85 = vld [vmem:[#allocation2] sm:$0x1]
  %v87 = vlaneseq
  %v88 = vshrl.u32 %v87, 7
  %v89 = vsub.s32 0, %v88
  %v90 = vrot.slane %v85, %v89
  %v96 = vunpack.c.l.b16 %v17
  %v97 = vunpack.c.h.b16 %v17
  %v98 = vunpack.c.l.b16 %v18
  %v99 = vunpack.c.h.b16 %v18
  %v100 = vunpack.c.l.b16 %v19
  %v101 = vunpack.c.h.b16 %v19
  %v102 = vunpack.c.l.b16 %v20
  %v103 = vunpack.c.h.b16 %v20
  %v104 = vpack.c.b16 %v100, %v96
  %v105 = vpack.c.b16 %v101, %v97
  %v106 = vpack.c.b16 %v102, %v98
  %v107 = vpack.c.b16 %v103, %v99
  %v176 = vunpack.c.l.b16 %v21
  %v177 = vunpack.c.l.b16 %v22
  %v178 = vunpack.c.l.b16 %v23
  %v179 = vunpack.c.l.b16 %v24
  %v180 = vunpack.c.l.b16 %v25
  %v181 = vunpack.c.l.b16 %v26
  %v182 = vunpack.c.l.b16 %v27
  %v183 = vunpack.c.l.b16 %v28
  %v184 = vunpack.c.l.b16 %v29
  %v185 = vunpack.c.l.b16 %v30
  %v186 = vunpack.c.l.b16 %v31
  %v187 = vunpack.c.l.b16 %v32
  %v188 = vunpack.c.l.b16 %v33
  %v189 = vunpack.c.l.b16 %v34
  %v190 = vunpack.c.l.b16 %v35
  %v191 = vunpack.c.l.b16 %v36
  %v192 = vunpack.c.l.b16 %v37
  %v193 = vunpack.c.l.b16 %v38
  %v194 = vunpack.c.l.b16 %v39
  %v195 = vunpack.c.l.b16 %v40
  %v196 = vunpack.c.l.b16 %v41
  %v197 = vunpack.c.l.b16 %v42
  %v198 = vunpack.c.l.b16 %v43
  %v199 = vunpack.c.l.b16 %v44
  %v200 = vunpack.c.l.b16 %v45
  %v201 = vunpack.c.l.b16 %v46
  %v202 = vunpack.c.l.b16 %v47
  %v203 = vunpack.c.l.b16 %v48
  %v204 = vunpack.c.l.b16 %v49
  %v205 = vunpack.c.l.b16 %v50
  %v206 = vunpack.c.l.b16 %v51
  %v207 = vunpack.c.l.b16 %v52
  %v208 = vunpack.c.l.b16 %v53
  %v209 = vunpack.c.l.b16 %v54
  %v210 = vunpack.c.l.b16 %v55
  %v211 = vunpack.c.l.b16 %v56
  %v212 = vunpack.c.l.b16 %v57
  %v213 = vunpack.c.l.b16 %v58
  %v214 = vunpack.c.l.b16 %v59
  %v215 = vunpack.c.l.b16 %v60
  %v216 = vunpack.c.l.b16 %v61
  %v217 = vunpack.c.l.b16 %v62
  %v218 = vunpack.c.l.b16 %v63
  %v219 = vunpack.c.l.b16 %v64
  %v220 = vunpack.c.l.b16 %v65
  %v221 = vunpack.c.l.b16 %v66
  %v222 = vunpack.c.l.b16 %v67
  %v223 = vunpack.c.l.b16 %v68
  %v224 = vunpack.c.l.b16 %v69
  %v225 = vunpack.c.l.b16 %v70
  %v226 = vunpack.c.l.b16 %v71
  %v227 = vunpack.c.l.b16 %v72
  %v228 = vunpack.c.l.b16 %v73
  %v229 = vunpack.c.l.b16 %v74
  %v230 = vunpack.c.l.b16 %v75
  %v231 = vunpack.c.l.b16 %v76
  %v232 = vunpack.c.l.b16 %v77
  %v233 = vunpack.c.l.b16 %v78
  %v234 = vunpack.c.l.b16 %v79
  %v235 = vunpack.c.l.b16 %v80
  %v236 = vunpack.c.l.b16 %v81
  %v237 = vunpack.c.l.b16 %v82
  %v238 = vunpack.c.l.b16 %v83
  %v239 = vunpack.c.l.b16 %v84
  %v240 = vpack.c.b16 %v177, %v176
  %v241 = vpack.c.b16 %v179, %v178
  %v242 = vpack.c.b16 %v181, %v180
  %v243 = vpack.c.b16 %v183, %v182
  %v244 = vpack.c.b16 %v185, %v184
  %v245 = vpack.c.b16 %v187, %v186
  %v246 = vpack.c.b16 %v189, %v188
  %v247 = vpack.c.b16 %v191, %v190
  %v248 = vpack.c.b16 %v193, %v192
  %v249 = vpack.c.b16 %v195, %v194
  %v250 = vpack.c.b16 %v197, %v196
  %v251 = vpack.c.b16 %v199, %v198
  %v252 = vpack.c.b16 %v201, %v200
  %v253 = vpack.c.b16 %v203, %v202
  %v254 = vpack.c.b16 %v205, %v204
  %v255 = vpack.c.b16 %v207, %v206
  %v256 = vpack.c.b16 %v209, %v208
  %v257 = vpack.c.b16 %v211, %v210
  %v258 = vpack.c.b16 %v213, %v212
  %v259 = vpack.c.b16 %v215, %v214
  %v260 = vpack.c.b16 %v217, %v216
  %v261 = vpack.c.b16 %v219, %v218
  %v262 = vpack.c.b16 %v221, %v220
  %v263 = vpack.c.b16 %v223, %v222
  %v264 = vpack.c.b16 %v225, %v224
  %v265 = vpack.c.b16 %v227, %v226
  %v266 = vpack.c.b16 %v229, %v228
  %v267 = vpack.c.b16 %v231, %v230
  %v268 = vpack.c.b16 %v233, %v232
  %v269 = vpack.c.b16 %v235, %v234
  %v270 = vpack.c.b16 %v237, %v236
  %v271 = vpack.c.b16 %v239, %v238
  %304 = vmatprep.subr.bf16.mxu0 0
  %305 = vmatpush1.bf16.msra.mxu0 %v247
  %306 = vmatprep.subr.bf16.mxu0 0
  %307 = vmatpush1.bf16.msra.mxu0 %v246
  %308 = vmatprep.subr.bf16.mxu0 0
  %309 = vmatpush1.bf16.msra.mxu0 %v245
  %310 = vmatprep.subr.bf16.mxu0 0
  %311 = vmatpush1.bf16.msra.mxu0 %v244
  %312 = vmatprep.subr.bf16.mxu0 0
  %313 = vmatpush1.bf16.msra.mxu0 %v243
  %314 = vmatprep.subr.bf16.mxu0 0
  %315 = vmatpush1.bf16.msra.mxu0 %v242
  %316 = vmatprep.subr.bf16.mxu0 0
  %317 = vmatpush1.bf16.msra.mxu0 %v241
  %318 = vmatprep.subr.bf16.mxu0 0
  %319 = vmatpush1.bf16.msra.mxu0 %v240
  %320 = vmatprep.subr.bf16.mxu0 0
  %321 = vmatpush2.bf16.msra.mxu0 %v255
  %322 = vmatprep.subr.bf16.mxu0 0
  %323 = vmatpush2.bf16.msra.mxu0 %v254
  %324 = vmatprep.subr.bf16.mxu0 0
  %325 = vmatpush2.bf16.msra.mxu0 %v253
  %326 = vmatprep.subr.bf16.mxu0 0
  %327 = vmatpush2.bf16.msra.mxu0 %v252
  %328 = vmatprep.subr.bf16.mxu0 0
  %329 = vmatpush2.bf16.msra.mxu0 %v251
  %330 = vmatprep.subr.bf16.mxu0 0
  %331 = vmatpush2.bf16.msra.mxu0 %v250
  %332 = vmatprep.subr.bf16.mxu0 0
  %333 = vmatpush2.bf16.msra.mxu0 %v249
  %334 = vmatprep.subr.bf16.mxu0 0
  %335 = vmatpush2.bf16.msra.mxu0 %v248
  %336 = vmatprep.mubr.bf16.mxu0 %v105
  %337 = vmatmul.mubr.bf16.gmra.mxu0 %v104
  %v338 = vpop.f32.mrf.mxu0
  %v339 = vadd.f32 %v90, %v338
  %v340 = vpop.f32.mrf.mxu0
  %v341 = vpop.f32.mrf.mxu0
  %v342 = vadd.f32 %v90, %v341
  %v343 = vpop.f32.mrf.mxu0
  %344 = vdwg.mxu0
  %345 = vmatprep.subr.bf16.mxu0 0
  %346 = vmatpush1.bf16.msra.mxu0 %v263
  %347 = vmatprep.subr.bf16.mxu0 0
  %348 = vmatpush1.bf16.msra.mxu0 %v262
  %349 = vmatprep.subr.bf16.mxu0 0
  %350 = vmatpush1.bf16.msra.mxu0 %v261
  %351 = vmatprep.subr.bf16.mxu0 0
  %352 = vmatpush1.bf16.msra.mxu0 %v260
  %353 = vmatprep.subr.bf16.mxu0 0
  %354 = vmatpush1.bf16.msra.mxu0 %v259
  %355 = vmatprep.subr.bf16.mxu0 0
  %356 = vmatpush1.bf16.msra.mxu0 %v258
  %357 = vmatprep.subr.bf16.mxu0 0
  %358 = vmatpush1.bf16.msra.mxu0 %v257
  %359 = vmatprep.subr.bf16.mxu0 0
  %360 = vmatpush1.bf16.msra.mxu0 %v256
  %361 = vmatprep.subr.bf16.mxu0 0
  %362 = vmatpush2.bf16.msra.mxu0 %v271
  %363 = vmatprep.subr.bf16.mxu0 0
  %364 = vmatpush2.bf16.msra.mxu0 %v270
  %365 = vmatprep.subr.bf16.mxu0 0
  %366 = vmatpush2.bf16.msra.mxu0 %v269
  %367 = vmatprep.subr.bf16.mxu0 0
  %368 = vmatpush2.bf16.msra.mxu0 %v268
  %369 = vmatprep.subr.bf16.mxu0 0
  %370 = vmatpush2.bf16.msra.mxu0 %v267
  %371 = vmatprep.subr.bf16.mxu0 0
  %372 = vmatpush2.bf16.msra.mxu0 %v266
  %373 = vmatprep.subr.bf16.mxu0 0
  %374 = vmatpush2.bf16.msra.mxu0 %v265
  %375 = vmatprep.subr.bf16.mxu0 0
  %376 = vmatpush2.bf16.msra.mxu0 %v264
  %377 = vmatprep.mubr.bf16.mxu0 %v107
  %378 = vmatmul.mubr.bf16.gmra.mxu0 %v106
  %v379 = vpop.f32.mrf.mxu0
  %v380 = vadd.f32 %v339, %v379
  %v381 = vpop.f32.mrf.mxu0
  %v382 = vpop.f32.mrf.mxu0
  %v383 = vadd.f32 %v342, %v382
  %v384 = vpop.f32.mrf.mxu0
  %385 = vdwg.mxu0
  %vm386 = vcmask 7168
  %387 = vst.msk [vmem:[%s3] sm:$0xff] %vm386, %v380
  %388 = vst.msk [vmem:[%s3 + $0x8] sm:$0xff] %vm386, %v383
  // Predicated region
  $region14: #{discriminator_forward.9} parent=0 // pred_check
    _
  $region15: #{discriminator_forward.9} parent=0 // pred_check_branch
    %390 = sbr.rel (0) target = $region17
  $region16: #{discriminator_forward.9} parent=0 // pred_region
    _
  $region17: #{discriminator_forward.9} parent=0 // pred_fallthru
    _
  // Predicated region
  $region18: #{discriminator_forward.9} parent=0 // pred_check
    _
  $region19: #{discriminator_forward.9} parent=0 // pred_check_branch
    %392 = sbr.rel (0) target = $region21
  $region20: #{discriminator_forward.9} parent=0 // pred_region
    _
  $region21: #{discriminator_forward.9} parent=0 // pred_fallthru
    _

</llo_original>
